<compile_context>
chip_gen: v6e
topology: v6e:2x2x1
jax: 0.10.0
libtpu: 0.0.40
codegen_flags: <defaults>
</compile_context>

<pallas_src>
import functools

import jax
import jax.numpy as jnp
from jax import lax
from jax.experimental import pallas as pl
from jax.experimental.pallas import tpu as pltpu


_HALO_ROWS = 8          # rows in the canvas halo block (>= 5 needed, 8 for alignment)


def _strip_config(H, W, r3_target=16):
    """Strip geometry: padded row stride S (mult. of 16 so every lane-block is a
    multiple of 128), strip rows R3 (mult. of 8), number of strips, canvas rows."""
    S = ((W + 6 + 15) // 16) * 16
    R3 = min(r3_target, ((H + 4 + 7) // 8) * 8)
    R3 = max(8, (R3 // 8) * 8)
    n_strips = -(-(H + 4) // R3)
    Hc = n_strips * R3 + _HALO_ROWS          # x sits at row offset 4 inside the canvas
    return S, R3, n_strips, Hc


def _fused_conv_kernel(cm_ref, ch_ref, w1_ref, w2_ref, f_ref, o_ref,
                       col_ref, y_ref, *, S, R3):
    """Per-strip body.
    cm_ref: (16, R3*S)  bf16  main canvas strip (flat, row stride S)
    ch_ref: (16, 8*S)   bf16  halo rows directly below the main strip
    w1_ref: (16, 144)   bf16  conv1 weights, (kh,kw,ci)-packed
    w2_ref: (4, 144)    bf16  flipped/swapped convT weights, pre-scaled by 1/6
    f_ref : (4, R3*S)   f32   folded bias/affine field
    o_ref : (4, R3*S)   f32   hard-sigmoid output strip
    col_ref: (144, (R3+2)*S) bf16  shared im2col scratch
    y_ref : (16, (R3+3)*S)   bf16  conv1 (bias-less) output strip + 1 slack row."""
    Lm = R3 * S              # flat length of the main canvas strip
    N1 = (R3 + 2) * S        # conv1 (Y0) positions computed for this strip
    N2 = R3 * S              # conv2 output positions for this strip

    # ---- im2col for conv1: 9 shifted windows of the (main + halo) canvas strip
    for kh in range(3):
        for kw in range(3):
            d = kh * S + kw
            r0 = (kh * 3 + kw) * 16
            col_ref[r0:r0 + 16, 0:Lm - d] = cm_ref[:, d:Lm]
            col_ref[r0:r0 + 16, Lm - d:N1] = ch_ref[:, 0:d + 2 * S]

    # ---- conv1 as ONE (16,144)x(144,N1) bf16 MXU contraction, f32 accumulate
    acc1 = lax.dot_general(w1_ref[...], col_ref[...],
                           dimension_numbers=(((1,), (0,)), ((), ())),
                           preferred_element_type=jnp.float32)
    # Bias is folded into the output field; the padding ring of Y0 is an exact
    # zero (pure matmul of zero inputs) and doubles as the transposed conv's
    # "full" padding ring.
    y_ref[:, 0:N1] = acc1.astype(y_ref.dtype)

    # ---- im2col for conv2 (transposed conv == full correlation w/ flipped w)
    for kh in range(3):
        for kw in range(3):
            d = kh * S + kw
            r0 = (kh * 3 + kw) * 16
            col_ref[r0:r0 + 16, 0:N2] = y_ref[:, d:d + N2]

    acc2 = lax.dot_general(w2_ref[...], col_ref[:, 0:N2],
                           dimension_numbers=(((1,), (0,)), ((), ())),
                           preferred_element_type=jnp.float32)
    # w2 pre-scaled by 1/6, field = (convT(b1) + b2 + 3)/6  ->  hard-sigmoid.
    o_ref[...] = jnp.clip(acc2 + f_ref[...], 0.0, 1.0).astype(o_ref.dtype)


def fused_forward_pallas(c_flat, w1m, w2m_s, field_flat, *, H, W):
    S, R3, n_strips, Hc = _strip_config(H, W)
    Lm, Lh = R3 * S, _HALO_ROWS * S
    N1, N2 = (R3 + 2) * S, R3 * S
    Cin = w1m.shape[0]
    Cout = w2m_s.shape[0]
    n_out = n_strips * N2

    kernel = functools.partial(_fused_conv_kernel, S=S, R3=R3)

    flops = 2 * 144 * (Cin * N1 + Cout * N2) * n_strips
    bytes_accessed = (2 * Cin * (Hc * S + n_strips * Lh)   # bf16 canvas (+ halo re-read)
                      + 2 * 144 * (Cin + Cout)             # bf16 packed weights
                      + 4 * Cout * n_out * 2)              # f32 field read + output write

    # VMEM budget: double-buffered blocks + scratches + f32 accumulator temps.
    est = (2 * 2 * Cin * (Lm + Lh)
           + 2 * 4 * Cout * N2 * 2
           + 2 * 144 * N1
           + 2 * Cin * (N1 + S)
           + 4 * (Cin * N1 + Cout * N2)
           + 2 * 144 * N1)                                  # operand-temp headroom
    vmem_limit = int(min(max(3 * est, 16 * 2**20), 96 * 2**20))

    halo_step = R3 // _HALO_ROWS

    return pl.pallas_call(
        kernel,
        out_shape=jax.ShapeDtypeStruct((Cout, n_out), jnp.float32),
        grid=(n_strips,),
        in_specs=[
            pl.BlockSpec((Cin, Lm), lambda i: (0, i)),                     # canvas strip
            pl.BlockSpec((Cin, Lh), lambda i: (0, (i + 1) * halo_step)),   # 8-row halo
            pl.BlockSpec((Cin, 144), lambda i: (0, 0)),                    # w1 (bf16)
            pl.BlockSpec((Cout, 144), lambda i: (0, 0)),                   # w2/6 (bf16)
            pl.BlockSpec((Cout, N2), lambda i: (0, i)),                    # bias/affine field
        ],
        out_specs=pl.BlockSpec((Cout, N2), lambda i: (0, i)),
        scratch_shapes=[pltpu.VMEM((144, N1), jnp.bfloat16),      # shared im2col
                        pltpu.VMEM((Cin, N1 + S), jnp.bfloat16)],  # Y0 strip (+ slack row)
        compiler_params=pltpu.CompilerParams(
            dimension_semantics=("parallel",),
            vmem_limit_bytes=vmem_limit),
        cost_estimate=pl.CostEstimate(flops=flops, transcendentals=0,
                                      bytes_accessed=bytes_accessed),
    )(c_flat, c_flat, w1m, w2m_s, field_flat)


def prepare_params(params, H, W):
    """Hoisted, called once: weight re-layout (bf16) + folded bias/affine field."""
    w1, b1, w2, b2 = params
    S, R3, n_strips, _ = _strip_config(H, W)
    O1, Ci = w1.shape[0], w1.shape[1]
    O2 = w2.shape[1]
    # Conv2d weight OIHW -> (O, (kh*3+kw)*Ci + ci), bf16 for the MXU.
    w1m = jnp.transpose(w1, (0, 2, 3, 1)).reshape(O1, 9 * Ci).astype(jnp.bfloat16)
    # ConvTranspose2d weight (I, O, kh, kw): spatial flip + channel swap, and
    # the hard-sigmoid 1/6 folded in.
    w2m = jnp.transpose(w2[:, :, ::-1, ::-1], (1, 2, 3, 0)).reshape(O2, 9 * w2.shape[0])
    w2m_s = (w2m * (1.0 / 6.0)).astype(jnp.bfloat16)
    # Position-dependent folded field:
    #   field = (conv_transpose(b1-constant conv1-output image) + b2 + 3) / 6
    # so the kernel epilogue is just clip(acc2 + field, 0, 1).
    bias_img = jnp.broadcast_to(b1[None, :, None, None], (1, O1, H + 2, W + 2))
    f0 = lax.conv_transpose(bias_img, w2, strides=(1, 1), padding="VALID",
                            dimension_numbers=("NCHW", "OIHW", "NCHW"),
                            transpose_kernel=True)[0] + b2[:, None, None]
    field = (f0 + 3.0) * (1.0 / 6.0)                      # (O2, H+4, W+4)
    field_canvas = jnp.zeros((O2, n_strips * R3, S), jnp.float32)
    field_canvas = field_canvas.at[:, :H + 4, :W + 4].set(field)
    return w1m, w2m_s, field_canvas.reshape(O2, n_strips * R3 * S)


@jax.jit
def model_forward(x_nchw, prepped):
    """x_nchw: (1, 16, H, W) f32 -> (1, 4, H+4, W+4) f32."""
    w1m, w2m_s, field_flat = prepped
    _, C, H, W = x_nchw.shape
    S, R3, n_strips, Hc = _strip_config(H, W)
    # Zero-padded bf16 input canvas (x at row/col offset 4), flattened row-major.
    # TODO(synk): replace with an in-kernel DMA of raw x into a VMEM zero ring.
    canvas = jnp.zeros((C, Hc, S), jnp.bfloat16)
    canvas = canvas.at[:, 4:4 + H, 4:4 + W].set(x_nchw[0].astype(jnp.bfloat16))
    c_flat = canvas.reshape(C, Hc * S)

    out_flat = fused_forward_pallas(c_flat, w1m, w2m_s, field_flat, H=H, W=W)

    # Kernel output is already flat CHW with row stride S; crop the scratch
    # columns / junk rows and add the batch dim.
    out = out_flat.reshape(-1, n_strips * R3, S)[:, :H + 4, :W + 4]
    return out[None]


def reference_forward(x_nchw, params):
    """Pure-JAX f32 reference (lax conv ops) for validation."""
    w1, b1, w2, b2 = params
    v1 = lax.conv_general_dilated(
        x_nchw, w1, window_strides=(1, 1), padding=((2, 2), (2, 2)),
        dimension_numbers=("NCHW", "OIHW", "NCHW")) + b1[None, :, None, None]
    v2 = lax.conv_transpose(
        v1, w2, strides=(1, 1), padding="VALID",
        dimension_numbers=("NCHW", "OIHW", "NCHW"),
        transpose_kernel=True) + b2[None, :, None, None]
    return jnp.clip(v2 + 3.0, 0.0, 6.0) / 6.0


def init_params(key):
    k1, k2, k3, k4 = jax.random.split(key, 4)
    w1 = jax.random.normal(k1, (16, 16, 3, 3), jnp.float32) * 0.1   # Conv2d weight
    b1 = jax.random.normal(k2, (16,), jnp.float32) * 0.1            # Conv2d bias
    w2 = jax.random.normal(k3, (16, 4, 3, 3), jnp.float32) * 0.1    # ConvTranspose weight (in,out,kH,kW)
    b2 = jax.random.normal(k4, (4,), jnp.float32) * 0.1             # ConvTranspose bias
    return w1, b1, w2, b2


def _check(H, W, key):
    kx, kp = jax.random.split(key)
    x = jax.random.normal(kx, (1, 16, H, W), jnp.float32)
    params = init_params(kp)
    prepped = prepare_params(params, H, W)          # hoisted weight/bias transforms
    out = jax.block_until_ready(model_forward(x, prepped))
    ref = jax.block_until_ready(reference_forward(x, params))
    assert out.shape == (1, 4, H + 4, W + 4), out.shape
    # bf16 MXU operands (per perf review) -> tolerance loosened from 1e-4.
    err = float(jnp.max(jnp.abs(out - ref)))
    assert jnp.allclose(out, ref, rtol=2e-2, atol=2e-2), err


if __name__ == "__main__":
    # Small spatial sizes (original model uses 1x16x128x128); channels fixed by
    # the weights.  The square case runs 2 pipelined strips; the rectangular
    # case additionally checks that H and W are not mixed up anywhere.
    key = jax.random.PRNGKey(0)
    k_a, k_b = jax.random.split(key)
    _check(16, 16, k_a)
    _check(24, 40, k_b)
    print("KERNEL_OK")
</pallas_src>

<mosaic_0001>
module attributes {stable_mosaic.version = 11 : i64} {
  func.func @_fused_conv_kernel(%arg0: i32, %arg1: memref<16x512xbf16, #tpu.memory_space<vmem>>, %arg2: memref<16x256xbf16, #tpu.memory_space<vmem>>, %arg3: memref<16x144xbf16, #tpu.memory_space<vmem>>, %arg4: memref<4x144xbf16, #tpu.memory_space<vmem>>, %arg5: memref<4x512xf32, #tpu.memory_space<vmem>>, %arg6: memref<4x512xf32, #tpu.memory_space<vmem>>, %arg7: memref<144x576xbf16, #tpu.memory_space<vmem>>, %arg8: memref<16x608xbf16, #tpu.memory_space<vmem>>) attributes {dimension_semantics = [#tpu.dimension_semantics<parallel>], iteration_bounds = array<i64: 2>, scalar_prefetch = 0 : i64, scratch_operands = 2 : i64, tpu.core_type = #tpu.core_type<tc>, window_params = [{transform_indices = @transform_0, window_bounds = array<i64: 16, 512>}, {transform_indices = @transform_1, window_bounds = array<i64: 16, 256>}, {pipeline_mode = #tpu.pipeline_mode<synchronous>, transform_indices = @transform_2, window_bounds = array<i64: 16, 144>}, {pipeline_mode = #tpu.pipeline_mode<synchronous>, transform_indices = @transform_3, window_bounds = array<i64: 4, 144>}, {transform_indices = @transform_4, window_bounds = array<i64: 4, 512>}, {transform_indices = @transform_5, window_bounds = array<i64: 4, 512>}]} {
    %c0 = arith.constant 0 : index
    %c0_0 = arith.constant 0 : index
    %0 = vector.load %arg1[%c0, %c0_0] : memref<16x512xbf16, #tpu.memory_space<vmem>>, vector<16x512xbf16>
    %c0_1 = arith.constant 0 : index
    %c0_2 = arith.constant 0 : index
    %1 = vector.load %arg7[%c0_1, %c0_2] : memref<144x576xbf16, #tpu.memory_space<vmem>>, vector<16x512xbf16>
    tpu.vector_store %arg7[%c0_1, %c0_2], %0 {strides = array<i32>} : memref<144x576xbf16, #tpu.memory_space<vmem>>, vector<16x512xbf16>,
    %c0_3 = arith.constant 0 : index
    %c0_4 = arith.constant 0 : index
    %2 = vector.load %arg2[%c0_3, %c0_4] : memref<16x256xbf16, #tpu.memory_space<vmem>>, vector<16x64xbf16>
    %c0_5 = arith.constant 0 : index
    %c512 = arith.constant 512 : index
    %3 = vector.load %arg7[%c0_5, %c512] : memref<144x576xbf16, #tpu.memory_space<vmem>>, vector<16x64xbf16>
    tpu.vector_store %arg7[%c0_5, %c512], %2 {strides = array<i32>} : memref<144x576xbf16, #tpu.memory_space<vmem>>, vector<16x64xbf16>,
    %c0_6 = arith.constant 0 : index
    %c1 = arith.constant 1 : index
    %4 = vector.load %arg1[%c0_6, %c1] : memref<16x512xbf16, #tpu.memory_space<vmem>>, vector<16x511xbf16>
    %c16 = arith.constant 16 : index
    %c0_7 = arith.constant 0 : index
    %5 = vector.load %arg7[%c16, %c0_7] : memref<144x576xbf16, #tpu.memory_space<vmem>>, vector<16x511xbf16>
    tpu.vector_store %arg7[%c16, %c0_7], %4 {strides = array<i32>} : memref<144x576xbf16, #tpu.memory_space<vmem>>, vector<16x511xbf16>,
    %c0_8 = arith.constant 0 : index
    %c0_9 = arith.constant 0 : index
    %6 = vector.load %arg2[%c0_8, %c0_9] : memref<16x256xbf16, #tpu.memory_space<vmem>>, vector<16x65xbf16>
    %c16_10 = arith.constant 16 : index
    %c511 = arith.constant 511 : index
    %7 = vector.load %arg7[%c16_10, %c511] : memref<144x576xbf16, #tpu.memory_space<vmem>>, vector<16x65xbf16>
    tpu.vector_store %arg7[%c16_10, %c511], %6 {strides = array<i32>} : memref<144x576xbf16, #tpu.memory_space<vmem>>, vector<16x65xbf16>,
    %c0_11 = arith.constant 0 : index
    %c2 = arith.constant 2 : index
    %8 = vector.load %arg1[%c0_11, %c2] : memref<16x512xbf16, #tpu.memory_space<vmem>>, vector<16x510xbf16>
    %c32 = arith.constant 32 : index
    %c0_12 = arith.constant 0 : index
    %9 = vector.load %arg7[%c32, %c0_12] : memref<144x576xbf16, #tpu.memory_space<vmem>>, vector<16x510xbf16>
    tpu.vector_store %arg7[%c32, %c0_12], %8 {strides = array<i32>} : memref<144x576xbf16, #tpu.memory_space<vmem>>, vector<16x510xbf16>,
    %c0_13 = arith.constant 0 : index
    %c0_14 = arith.constant 0 : index
    %10 = vector.load %arg2[%c0_13, %c0_14] : memref<16x256xbf16, #tpu.memory_space<vmem>>, vector<16x66xbf16>
    %c32_15 = arith.constant 32 : index
    %c510 = arith.constant 510 : index
    %11 = vector.load %arg7[%c32_15, %c510] : memref<144x576xbf16, #tpu.memory_space<vmem>>, vector<16x66xbf16>
    tpu.vector_store %arg7[%c32_15, %c510], %10 {strides = array<i32>} : memref<144x576xbf16, #tpu.memory_space<vmem>>, vector<16x66xbf16>,
    %c0_16 = arith.constant 0 : index
    %c32_17 = arith.constant 32 : index
    %12 = vector.load %arg1[%c0_16, %c32_17] : memref<16x512xbf16, #tpu.memory_space<vmem>>, vector<16x480xbf16>
    %c48 = arith.constant 48 : index
    %c0_18 = arith.constant 0 : index
    %13 = vector.load %arg7[%c48, %c0_18] : memref<144x576xbf16, #tpu.memory_space<vmem>>, vector<16x480xbf16>
    tpu.vector_store %arg7[%c48, %c0_18], %12 {strides = array<i32>} : memref<144x576xbf16, #tpu.memory_space<vmem>>, vector<16x480xbf16>,
    %c0_19 = arith.constant 0 : index
    %c0_20 = arith.constant 0 : index
    %14 = vector.load %arg2[%c0_19, %c0_20] : memref<16x256xbf16, #tpu.memory_space<vmem>>, vector<16x96xbf16>
    %c48_21 = arith.constant 48 : index
    %c480 = arith.constant 480 : index
    %15 = vector.load %arg7[%c48_21, %c480] : memref<144x576xbf16, #tpu.memory_space<vmem>>, vector<16x96xbf16>
    tpu.vector_store %arg7[%c48_21, %c480], %14 {strides = array<i32>} : memref<144x576xbf16, #tpu.memory_space<vmem>>, vector<16x96xbf16>,
    %c0_22 = arith.constant 0 : index
    %c33 = arith.constant 33 : index
    %16 = vector.load %arg1[%c0_22, %c33] : memref<16x512xbf16, #tpu.memory_space<vmem>>, vector<16x479xbf16>
    %c64 = arith.constant 64 : index
    %c0_23 = arith.constant 0 : index
    %17 = vector.load %arg7[%c64, %c0_23] : memref<144x576xbf16, #tpu.memory_space<vmem>>, vector<16x479xbf16>
    tpu.vector_store %arg7[%c64, %c0_23], %16 {strides = array<i32>} : memref<144x576xbf16, #tpu.memory_space<vmem>>, vector<16x479xbf16>,
    %c0_24 = arith.constant 0 : index
    %c0_25 = arith.constant 0 : index
    %18 = vector.load %arg2[%c0_24, %c0_25] : memref<16x256xbf16, #tpu.memory_space<vmem>>, vector<16x97xbf16>
    %c64_26 = arith.constant 64 : index
    %c479 = arith.constant 479 : index
    %19 = vector.load %arg7[%c64_26, %c479] : memref<144x576xbf16, #tpu.memory_space<vmem>>, vector<16x97xbf16>
    tpu.vector_store %arg7[%c64_26, %c479], %18 {strides = array<i32>} : memref<144x576xbf16, #tpu.memory_space<vmem>>, vector<16x97xbf16>,
    %c0_27 = arith.constant 0 : index
    %c34 = arith.constant 34 : index
    %20 = vector.load %arg1[%c0_27, %c34] : memref<16x512xbf16, #tpu.memory_space<vmem>>, vector<16x478xbf16>
    %c80 = arith.constant 80 : index
    %c0_28 = arith.constant 0 : index
    %21 = vector.load %arg7[%c80, %c0_28] : memref<144x576xbf16, #tpu.memory_space<vmem>>, vector<16x478xbf16>
    tpu.vector_store %arg7[%c80, %c0_28], %20 {strides = array<i32>} : memref<144x576xbf16, #tpu.memory_space<vmem>>, vector<16x478xbf16>,
    %c0_29 = arith.constant 0 : index
    %c0_30 = arith.constant 0 : index
    %22 = vector.load %arg2[%c0_29, %c0_30] : memref<16x256xbf16, #tpu.memory_space<vmem>>, vector<16x98xbf16>
    %c80_31 = arith.constant 80 : index
    %c478 = arith.constant 478 : index
    %23 = vector.load %arg7[%c80_31, %c478] : memref<144x576xbf16, #tpu.memory_space<vmem>>, vector<16x98xbf16>
    tpu.vector_store %arg7[%c80_31, %c478], %22 {strides = array<i32>} : memref<144x576xbf16, #tpu.memory_space<vmem>>, vector<16x98xbf16>,
    %c0_32 = arith.constant 0 : index
    %c64_33 = arith.constant 64 : index
    %24 = vector.load %arg1[%c0_32, %c64_33] : memref<16x512xbf16, #tpu.memory_space<vmem>>, vector<16x448xbf16>
    %c96 = arith.constant 96 : index
    %c0_34 = arith.constant 0 : index
    %25 = vector.load %arg7[%c96, %c0_34] : memref<144x576xbf16, #tpu.memory_space<vmem>>, vector<16x448xbf16>
    tpu.vector_store %arg7[%c96, %c0_34], %24 {strides = array<i32>} : memref<144x576xbf16, #tpu.memory_space<vmem>>, vector<16x448xbf16>,
    %c0_35 = arith.constant 0 : index
    %c0_36 = arith.constant 0 : index
    %26 = vector.load %arg2[%c0_35, %c0_36] : memref<16x256xbf16, #tpu.memory_space<vmem>>, vector<16x128xbf16>
    %c96_37 = arith.constant 96 : index
    %c448 = arith.constant 448 : index
    %27 = vector.load %arg7[%c96_37, %c448] : memref<144x576xbf16, #tpu.memory_space<vmem>>, vector<16x128xbf16>
    tpu.vector_store %arg7[%c96_37, %c448], %26 {strides = array<i32>} : memref<144x576xbf16, #tpu.memory_space<vmem>>, vector<16x128xbf16>,
    %c0_38 = arith.constant 0 : index
    %c65 = arith.constant 65 : index
    %28 = vector.load %arg1[%c0_38, %c65] : memref<16x512xbf16, #tpu.memory_space<vmem>>, vector<16x447xbf16>
    %c112 = arith.constant 112 : index
    %c0_39 = arith.constant 0 : index
    %29 = vector.load %arg7[%c112, %c0_39] : memref<144x576xbf16, #tpu.memory_space<vmem>>, vector<16x447xbf16>
    tpu.vector_store %arg7[%c112, %c0_39], %28 {strides = array<i32>} : memref<144x576xbf16, #tpu.memory_space<vmem>>, vector<16x447xbf16>,
    %c0_40 = arith.constant 0 : index
    %c0_41 = arith.constant 0 : index
    %30 = vector.load %arg2[%c0_40, %c0_41] : memref<16x256xbf16, #tpu.memory_space<vmem>>, vector<16x129xbf16>
    %c112_42 = arith.constant 112 : index
    %c447 = arith.constant 447 : index
    %31 = vector.load %arg7[%c112_42, %c447] : memref<144x576xbf16, #tpu.memory_space<vmem>>, vector<16x129xbf16>
    tpu.vector_store %arg7[%c112_42, %c447], %30 {strides = array<i32>} : memref<144x576xbf16, #tpu.memory_space<vmem>>, vector<16x129xbf16>,
    %c0_43 = arith.constant 0 : index
    %c66 = arith.constant 66 : index
    %32 = vector.load %arg1[%c0_43, %c66] : memref<16x512xbf16, #tpu.memory_space<vmem>>, vector<16x446xbf16>
    %c128 = arith.constant 128 : index
    %c0_44 = arith.constant 0 : index
    %33 = vector.load %arg7[%c128, %c0_44] : memref<144x576xbf16, #tpu.memory_space<vmem>>, vector<16x446xbf16>
    tpu.vector_store %arg7[%c128, %c0_44], %32 {strides = array<i32>} : memref<144x576xbf16, #tpu.memory_space<vmem>>, vector<16x446xbf16>,
    %c0_45 = arith.constant 0 : index
    %c0_46 = arith.constant 0 : index
    %34 = vector.load %arg2[%c0_45, %c0_46] : memref<16x256xbf16, #tpu.memory_space<vmem>>, vector<16x130xbf16>
    %c128_47 = arith.constant 128 : index
    %c446 = arith.constant 446 : index
    %35 = vector.load %arg7[%c128_47, %c446] : memref<144x576xbf16, #tpu.memory_space<vmem>>, vector<16x130xbf16>
    tpu.vector_store %arg7[%c128_47, %c446], %34 {strides = array<i32>} : memref<144x576xbf16, #tpu.memory_space<vmem>>, vector<16x130xbf16>,
    %c0_48 = arith.constant 0 : index
    %c0_49 = arith.constant 0 : index
    %36 = vector.load %arg3[%c0_48, %c0_49] : memref<16x144xbf16, #tpu.memory_space<vmem>>, vector<16x144xbf16>
    %c0_50 = arith.constant 0 : index
    %c0_51 = arith.constant 0 : index
    %37 = vector.load %arg7[%c0_50, %c0_51] : memref<144x576xbf16, #tpu.memory_space<vmem>>, vector<144x576xbf16>
    %cst = arith.constant dense<0.000000e+00> : vector<16x576xf32>
    %38 = tpu.matmul %36, %37, %cst {dimension_numbers = #tpu.dot_dimension_numbers<[1], [0], [0], [1], [0, 0, 1, 1], [], []>} : vector<16x144xbf16>, vector<144x576xbf16>, vector<16x576xf32> -> vector<16x576xf32>
    %39 = arith.truncf %38 : vector<16x576xf32> to vector<16x576xbf16>
    %c0_52 = arith.constant 0 : index
    %c0_53 = arith.constant 0 : index
    %40 = vector.load %arg8[%c0_52, %c0_53] : memref<16x608xbf16, #tpu.memory_space<vmem>>, vector<16x576xbf16>
    tpu.vector_store %arg8[%c0_52, %c0_53], %39 {strides = array<i32>} : memref<16x608xbf16, #tpu.memory_space<vmem>>, vector<16x576xbf16>,
    %c0_54 = arith.constant 0 : index
    %c0_55 = arith.constant 0 : index
    %41 = vector.load %arg8[%c0_54, %c0_55] : memref<16x608xbf16, #tpu.memory_space<vmem>>, vector<16x512xbf16>
    %c0_56 = arith.constant 0 : index
    %c0_57 = arith.constant 0 : index
    %42 = vector.load %arg7[%c0_56, %c0_57] : memref<144x576xbf16, #tpu.memory_space<vmem>>, vector<16x512xbf16>
    tpu.vector_store %arg7[%c0_56, %c0_57], %41 {strides = array<i32>} : memref<144x576xbf16, #tpu.memory_space<vmem>>, vector<16x512xbf16>,
    %c0_58 = arith.constant 0 : index
    %c1_59 = arith.constant 1 : index
    %43 = vector.load %arg8[%c0_58, %c1_59] : memref<16x608xbf16, #tpu.memory_space<vmem>>, vector<16x512xbf16>
    %c16_60 = arith.constant 16 : index
    %c0_61 = arith.constant 0 : index
    %44 = vector.load %arg7[%c16_60, %c0_61] : memref<144x576xbf16, #tpu.memory_space<vmem>>, vector<16x512xbf16>
    tpu.vector_store %arg7[%c16_60, %c0_61], %43 {strides = array<i32>} : memref<144x576xbf16, #tpu.memory_space<vmem>>, vector<16x512xbf16>,
    %c0_62 = arith.constant 0 : index
    %c2_63 = arith.constant 2 : index
    %45 = vector.load %arg8[%c0_62, %c2_63] : memref<16x608xbf16, #tpu.memory_space<vmem>>, vector<16x512xbf16>
    %c32_64 = arith.constant 32 : index
    %c0_65 = arith.constant 0 : index
    %46 = vector.load %arg7[%c32_64, %c0_65] : memref<144x576xbf16, #tpu.memory_space<vmem>>, vector<16x512xbf16>
    tpu.vector_store %arg7[%c32_64, %c0_65], %45 {strides = array<i32>} : memref<144x576xbf16, #tpu.memory_space<vmem>>, vector<16x512xbf16>,
    %c0_66 = arith.constant 0 : index
    %c32_67 = arith.constant 32 : index
    %47 = vector.load %arg8[%c0_66, %c32_67] : memref<16x608xbf16, #tpu.memory_space<vmem>>, vector<16x512xbf16>
    %c48_68 = arith.constant 48 : index
    %c0_69 = arith.constant 0 : index
    %48 = vector.load %arg7[%c48_68, %c0_69] : memref<144x576xbf16, #tpu.memory_space<vmem>>, vector<16x512xbf16>
    tpu.vector_store %arg7[%c48_68, %c0_69], %47 {strides = array<i32>} : memref<144x576xbf16, #tpu.memory_space<vmem>>, vector<16x512xbf16>,
    %c0_70 = arith.constant 0 : index
    %c33_71 = arith.constant 33 : index
    %49 = vector.load %arg8[%c0_70, %c33_71] : memref<16x608xbf16, #tpu.memory_space<vmem>>, vector<16x512xbf16>
    %c64_72 = arith.constant 64 : index
    %c0_73 = arith.constant 0 : index
    %50 = vector.load %arg7[%c64_72, %c0_73] : memref<144x576xbf16, #tpu.memory_space<vmem>>, vector<16x512xbf16>
    tpu.vector_store %arg7[%c64_72, %c0_73], %49 {strides = array<i32>} : memref<144x576xbf16, #tpu.memory_space<vmem>>, vector<16x512xbf16>,
    %c0_74 = arith.constant 0 : index
    %c34_75 = arith.constant 34 : index
    %51 = vector.load %arg8[%c0_74, %c34_75] : memref<16x608xbf16, #tpu.memory_space<vmem>>, vector<16x512xbf16>
    %c80_76 = arith.constant 80 : index
    %c0_77 = arith.constant 0 : index
    %52 = vector.load %arg7[%c80_76, %c0_77] : memref<144x576xbf16, #tpu.memory_space<vmem>>, vector<16x512xbf16>
    tpu.vector_store %arg7[%c80_76, %c0_77], %51 {strides = array<i32>} : memref<144x576xbf16, #tpu.memory_space<vmem>>, vector<16x512xbf16>,
    %c0_78 = arith.constant 0 : index
    %c64_79 = arith.constant 64 : index
    %53 = vector.load %arg8[%c0_78, %c64_79] : memref<16x608xbf16, #tpu.memory_space<vmem>>, vector<16x512xbf16>
    %c96_80 = arith.constant 96 : index
    %c0_81 = arith.constant 0 : index
    %54 = vector.load %arg7[%c96_80, %c0_81] : memref<144x576xbf16, #tpu.memory_space<vmem>>, vector<16x512xbf16>
    tpu.vector_store %arg7[%c96_80, %c0_81], %53 {strides = array<i32>} : memref<144x576xbf16, #tpu.memory_space<vmem>>, vector<16x512xbf16>,
    %c0_82 = arith.constant 0 : index
    %c65_83 = arith.constant 65 : index
    %55 = vector.load %arg8[%c0_82, %c65_83] : memref<16x608xbf16, #tpu.memory_space<vmem>>, vector<16x512xbf16>
    %c112_84 = arith.constant 112 : index
    %c0_85 = arith.constant 0 : index
    %56 = vector.load %arg7[%c112_84, %c0_85] : memref<144x576xbf16, #tpu.memory_space<vmem>>, vector<16x512xbf16>
    tpu.vector_store %arg7[%c112_84, %c0_85], %55 {strides = array<i32>} : memref<144x576xbf16, #tpu.memory_space<vmem>>, vector<16x512xbf16>,
    %c0_86 = arith.constant 0 : index
    %c66_87 = arith.constant 66 : index
    %57 = vector.load %arg8[%c0_86, %c66_87] : memref<16x608xbf16, #tpu.memory_space<vmem>>, vector<16x512xbf16>
    %c128_88 = arith.constant 128 : index
    %c0_89 = arith.constant 0 : index
    %58 = vector.load %arg7[%c128_88, %c0_89] : memref<144x576xbf16, #tpu.memory_space<vmem>>, vector<16x512xbf16>
    tpu.vector_store %arg7[%c128_88, %c0_89], %57 {strides = array<i32>} : memref<144x576xbf16, #tpu.memory_space<vmem>>, vector<16x512xbf16>,
    %c0_90 = arith.constant 0 : index
    %c0_91 = arith.constant 0 : index
    %59 = vector.load %arg4[%c0_90, %c0_91] : memref<4x144xbf16, #tpu.memory_space<vmem>>, vector<4x144xbf16>
    %c0_92 = arith.constant 0 : index
    %c0_93 = arith.constant 0 : index
    %60 = vector.load %arg7[%c0_92, %c0_93] : memref<144x576xbf16, #tpu.memory_space<vmem>>, vector<144x512xbf16>
    %cst_94 = arith.constant dense<0.000000e+00> : vector<4x512xf32>
    %61 = tpu.matmul %59, %60, %cst_94 {dimension_numbers = #tpu.dot_dimension_numbers<[1], [0], [0], [1], [0, 0, 1, 1], [], []>} : vector<4x144xbf16>, vector<144x512xbf16>, vector<4x512xf32> -> vector<4x512xf32>
    %c0_95 = arith.constant 0 : index
    %c0_96 = arith.constant 0 : index
    %62 = vector.load %arg5[%c0_95, %c0_96] : memref<4x512xf32, #tpu.memory_space<vmem>>, vector<4x512xf32>
    %63 = arith.addf %61, %62 : vector<4x512xf32>
    %cst_97 = arith.constant 0.000000e+00 : f32
    %cst_98 = arith.constant 1.000000e+00 : f32
    %64 = vector.broadcast %cst_97 : f32 to vector<4x512xf32>
    %65 = arith.maximumf %64, %63 : vector<4x512xf32>
    %66 = vector.broadcast %cst_98 : f32 to vector<4x512xf32>
    %67 = arith.minimumf %66, %65 : vector<4x512xf32>
    %c0_99 = arith.constant 0 : index
    %c0_100 = arith.constant 0 : index
    %68 = vector.load %arg6[%c0_99, %c0_100] : memref<4x512xf32, #tpu.memory_space<vmem>>, vector<4x512xf32>
    tpu.vector_store %arg6[%c0_99, %c0_100], %67 {strides = array<i32>} : memref<4x512xf32, #tpu.memory_space<vmem>>, vector<4x512xf32>,
    return
  }
  func.func @transform_0(%arg0: i32) -> (i32, i32) {
    %c0_i32 = arith.constant 0 : i32
    %c0_i32_0 = arith.constant 0 : i32
    return %c0_i32, %arg0 : i32, i32
  }
  func.func @transform_1(%arg0: i32) -> (i32, i32) {
    %c1_i32 = arith.constant 1 : i32
    %0 = arith.addi %arg0, %c1_i32 : i32
    %c2_i32 = arith.constant 2 : i32
    %1 = arith.muli %0, %c2_i32 : i32
    %c0_i32 = arith.constant 0 : i32
    %c0_i32_0 = arith.constant 0 : i32
    return %c0_i32, %1 : i32, i32
  }
  func.func @transform_2(%arg0: i32) -> (i32, i32) {
    %c0_i32 = arith.constant 0 : i32
    %c0_i32_0 = arith.constant 0 : i32
    %c0_i32_1 = arith.constant 0 : i32
    return %c0_i32, %c0_i32_0 : i32, i32
  }
  func.func @transform_3(%arg0: i32) -> (i32, i32) {
    %c0_i32 = arith.constant 0 : i32
    %c0_i32_0 = arith.constant 0 : i32
    %c0_i32_1 = arith.constant 0 : i32
    return %c0_i32, %c0_i32_0 : i32, i32
  }
  func.func @transform_4(%arg0: i32) -> (i32, i32) {
    %c0_i32 = arith.constant 0 : i32
    %c0_i32_0 = arith.constant 0 : i32
    return %c0_i32, %arg0 : i32, i32
  }
  func.func @transform_5(%arg0: i32) -> (i32, i32) {
    %c0_i32 = arith.constant 0 : i32
    %c0_i32_0 = arith.constant 0 : i32
    return %c0_i32, %arg0 : i32, i32
  }
}

</mosaic_0001>

<llo_original>
// kernel: model_forward.1
$region0: #{model_forward.1}
  #allocation0 [shape = 'u32[]', space=smem, size = 0x4, offset = 0x4, fixed_abs, tag = 'smem constant byte address 0x4 - core index']
  #allocation1 [shape = 'u32[144,128]{1,0:T(1,128)}', space=vmem, size = 0x12000, scoped, tag = 'internal scratch']
  #allocation2 [shape = 'bf16[144,576]{1,0:T(8,128)(2,1)}', space=vmem, size = 0x2d000, scoped, tag = 'scratch operand']
  #allocation3 [shape = 'bf16[16,608]{1,0:T(8,128)(2,1)}', space=vmem, size = 0x5000, scoped, tag = 'scratch operand']
  %s0 = inlined_call_operand.vmem [shape: bf16[16,1280], index: 0, kind: input, shape index: {}, may-alias: {0,1}]
  %s1 = inlined_call_operand.vmem [shape: bf16[16,1280], index: 1, kind: input, shape index: {}, may-alias: {0,1}]
  %s2 = inlined_call_operand.vmem [shape: bf16[16,144], index: 2, kind: input, shape index: {}]
  %s3 = inlined_call_operand.vmem [shape: bf16[4,144], index: 3, kind: input, shape index: {}]
  %s4 = inlined_call_operand.vmem [shape: f32[4,1024], index: 4, kind: input, shape index: {}]
  %s5 = inlined_call_operand.vmem [shape: f32[4,1024], index: 5, kind: output, shape index: {}]
  %s6 = sld [smem:[#allocation0]]
  $region157: #{model_forward.1} parent=0
    _
  %s8 = ssub.s32 1, %s6
  %s9 = scalar_select 0, %s8, %s6
  $region1: #{model_forward.1} parent=0
    #allocation4 [shape = 'u8[32768]{0}', space=vmem, size = 0x8000, scoped, tag = 'input window, operand 0']
    #allocation5 [shape = 'u8[16384]{0}', space=vmem, size = 0x4000, scoped, tag = 'input window, operand 1']
    loop: start=0, step=1, limit=4
    $region2: #{model_forward.1} parent=1 // loop_pre_header
      _
    $region3: #{model_forward.1} parent=1 // loop_header
      %s11 = sphi 0, %s15
      %p12 = scmp.ge.s32.totalorder %s11, 4
      %s21 = sphi 0, %s23
      %s24 = sphi 0, %s21
      %s25 = sphi 0, %s24
      %s41 = sphi 0, %s25
      %s51 = sphi 0, %s53
      %s54 = sphi 0, %s51
      %s55 = sphi 0, %s54
      %s71 = sphi 0, %s55
      %s75 = sphi 0, %s75
      %s77 = sphi 0, %s75
      %s78 = sphi 0, %s77
      %s92 = sphi 0, %s78
      %s96 = sphi 0, %s96
      %s98 = sphi 0, %s96
      %s99 = sphi 0, %s98
      %s113 = sphi 0, %s99
      %s119 = sphi 0, %s121
      %s122 = sphi 0, %s119
      %s123 = sphi 0, %s122
      %s139 = sphi 0, %s123
      %s145 = sphi 0, %s147
      %s148 = sphi 0, %s145
      %s149 = sphi 0, %s148
      %s165 = sphi 0, %s149
    $region4: #{model_forward.1} parent=1 // loop_header_branch
      %14 = sbr.rel (%p12) target = $region8
    $region5: #{model_forward.1} parent=1 // loop_body
      %s16 = ssub.s32 %s11, 1
      %s17 = ssub.s32 %s11, 2
      %s18 = sadd.s32 %s11, 1
      %s19 = ssub.s32 %s11, %s18
      %p20 = scmp.eq.s32.totalorder %s19, 0
      %s22 = sadd.s32 %s21, 1
      %s23 = scalar_select %p20, %s21, %s22
      %p26 = pneg %p20
      %p27 = scmp.eq.s32.totalorder %s11, 1
      %p28 = por %p26, %p27
      %p29 = scmp.ne.s32.totalorder %s21, %s24
      %p30 = scmp.eq.s32.totalorder %s11, 0
      %p31 = por %p29, %p30
      %p32 = scmp.ne.s32.totalorder %s21, %s24
      %p33 = scmp.eq.s32.totalorder %s16, 1
      %p34 = por %p32, %p33
      %p35 = scmp.ne.s32.totalorder %s24, %s25
      %p36 = scmp.eq.s32.totalorder %s16, 0
      %p37 = por %p35, %p36
      %p38 = scmp.ne.s32.totalorder %s24, %s25
      %p39 = scmp.eq.s32.totalorder %s17, 1
      %p40 = por %p38, %p39
      %p42 = scmp.ne.s32.totalorder %s25, %s41
      %p43 = scmp.eq.s32.totalorder %s17, 0
      %p44 = por %p42, %p43
      %s45 = sadd.s32 %s11, 1
      %s46 = smul.u32 %s45, 2
      %s47 = sadd.s32 %s18, 1
      %s48 = smul.u32 %s47, 2
      %s49 = ssub.s32 %s46, %s48
      %p50 = scmp.eq.s32.totalorder %s49, 0
      %s52 = sadd.s32 %s51, 1
      %s53 = scalar_select %p50, %s51, %s52
      %p56 = pneg %p50
      %p57 = scmp.eq.s32.totalorder %s11, 1
      %p58 = por %p56, %p57
      %p59 = scmp.ne.s32.totalorder %s51, %s54
      %p60 = scmp.eq.s32.totalorder %s11, 0
      %p61 = por %p59, %p60
      %p62 = scmp.ne.s32.totalorder %s51, %s54
      %p63 = scmp.eq.s32.totalorder %s16, 1
      %p64 = por %p62, %p63
      %p65 = scmp.ne.s32.totalorder %s54, %s55
      %p66 = scmp.eq.s32.totalorder %s16, 0
      %p67 = por %p65, %p66
      %p68 = scmp.ne.s32.totalorder %s54, %s55
      %p69 = scmp.eq.s32.totalorder %s17, 1
      %p70 = por %p68, %p69
      %p72 = scmp.ne.s32.totalorder %s55, %s71
      %p73 = scmp.eq.s32.totalorder %s17, 0
      %p74 = por %p72, %p73
      %s76 = sadd.s32 %s75, 1
      %p79 = scmp.eq.s32.totalorder %s11, 1
      %p80 = scmp.ne.s32.totalorder %s75, %s77
      %p81 = scmp.eq.s32.totalorder %s11, 0
      %p82 = por %p80, %p81
      %p83 = scmp.ne.s32.totalorder %s75, %s77
      %p84 = scmp.eq.s32.totalorder %s16, 1
      %p85 = por %p83, %p84
      %p86 = scmp.ne.s32.totalorder %s77, %s78
      %p87 = scmp.eq.s32.totalorder %s16, 0
      %p88 = por %p86, %p87
      %p89 = scmp.ne.s32.totalorder %s77, %s78
      %p90 = scmp.eq.s32.totalorder %s17, 1
      %p91 = por %p89, %p90
      %p93 = scmp.ne.s32.totalorder %s78, %s92
      %p94 = scmp.eq.s32.totalorder %s17, 0
      %p95 = por %p93, %p94
      %s97 = sadd.s32 %s96, 1
      %p100 = scmp.eq.s32.totalorder %s11, 1
      %p101 = scmp.ne.s32.totalorder %s96, %s98
      %p102 = scmp.eq.s32.totalorder %s11, 0
      %p103 = por %p101, %p102
      %p104 = scmp.ne.s32.totalorder %s96, %s98
      %p105 = scmp.eq.s32.totalorder %s16, 1
      %p106 = por %p104, %p105
      %p107 = scmp.ne.s32.totalorder %s98, %s99
      %p108 = scmp.eq.s32.totalorder %s16, 0
      %p109 = por %p107, %p108
      %p110 = scmp.ne.s32.totalorder %s98, %s99
      %p111 = scmp.eq.s32.totalorder %s17, 1
      %p112 = por %p110, %p111
      %p114 = scmp.ne.s32.totalorder %s99, %s113
      %p115 = scmp.eq.s32.totalorder %s17, 0
      %p116 = por %p114, %p115
      %s117 = ssub.s32 %s11, %s18
      %p118 = scmp.eq.s32.totalorder %s117, 0
      %s120 = sadd.s32 %s119, 1
      %s121 = scalar_select %p118, %s119, %s120
      %p124 = pneg %p118
      %p125 = scmp.eq.s32.totalorder %s11, 1
      %p126 = por %p124, %p125
      %p127 = scmp.ne.s32.totalorder %s119, %s122
      %p128 = scmp.eq.s32.totalorder %s11, 0
      %p129 = por %p127, %p128
      %p130 = scmp.ne.s32.totalorder %s119, %s122
      %p131 = scmp.eq.s32.totalorder %s16, 1
      %p132 = por %p130, %p131
      %p133 = scmp.ne.s32.totalorder %s122, %s123
      %p134 = scmp.eq.s32.totalorder %s16, 0
      %p135 = por %p133, %p134
      %p136 = scmp.ne.s32.totalorder %s122, %s123
      %p137 = scmp.eq.s32.totalorder %s17, 1
      %p138 = por %p136, %p137
      %p140 = scmp.ne.s32.totalorder %s123, %s139
      %p141 = scmp.eq.s32.totalorder %s17, 0
      %p142 = por %p140, %p141
      %s143 = ssub.s32 %s11, %s18
      %p144 = scmp.eq.s32.totalorder %s143, 0
      %s146 = sadd.s32 %s145, 1
      %s147 = scalar_select %p144, %s145, %s146
      %p150 = pneg %p144
      %p151 = scmp.eq.s32.totalorder %s11, 1
      %p152 = por %p150, %p151
      %p153 = scmp.ne.s32.totalorder %s145, %s148
      %p154 = scmp.eq.s32.totalorder %s11, 0
      %p155 = por %p153, %p154
      %p156 = scmp.ne.s32.totalorder %s145, %s148
      %p157 = scmp.eq.s32.totalorder %s16, 1
      %p158 = por %p156, %p157
      %p159 = scmp.ne.s32.totalorder %s148, %s149
      %p160 = scmp.eq.s32.totalorder %s16, 0
      %p161 = por %p159, %p160
      %p162 = scmp.ne.s32.totalorder %s148, %s149
      %p163 = scmp.eq.s32.totalorder %s17, 1
      %p164 = por %p162, %p163
      %p166 = scmp.ne.s32.totalorder %s149, %s165
      %p167 = scmp.eq.s32.totalorder %s17, 0
      %p168 = por %p166, %p167
      %p169 = scmp.le.s32.totalorder 1, %s11
      %p170 = scmp.lt.s32.totalorder %s11, 3
      %p171 = pnand %p169, %p170
      %p172 = pneg %p171
      // Predicated region
      $region9: #{model_forward.1} parent=5 // pred_check
        _
      $region10: #{model_forward.1} parent=5 // pred_check_branch
        %174 = sbr.rel (%p171) target = $region12
      $region11: #{model_forward.1} parent=5 // pred_region
        %s175 = ssub.s32 %s11, 1
        // Predicated region
        $region13: #{model_forward.1} parent=11 // pred_check
          %p176 = pneg %p88
        $region14: #{model_forward.1} parent=11 // pred_check_branch
          %178 = sbr.rel (%p176) target = $region16
        $region15: #{model_forward.1} parent=11 // pred_region
          _
        $region16: #{model_forward.1} parent=11 // pred_fallthru
          _
        // Predicated region
        $region17: #{model_forward.1} parent=11 // pred_check
          %p179 = pneg %p109
        $region18: #{model_forward.1} parent=11 // pred_check_branch
          %181 = sbr.rel (%p179) target = $region20
        $region19: #{model_forward.1} parent=11 // pred_region
          _
        $region20: #{model_forward.1} parent=11 // pred_fallthru
          _
      $region12: #{model_forward.1} parent=5 // pred_fallthru
        _
      %p182 = scmp.lt.s32.totalorder %s11, 2
      // Predicated region
      $region21: #{model_forward.1} parent=5 // pred_check
        %p183 = pneg %p182
      $region22: #{model_forward.1} parent=5 // pred_check_branch
        %185 = sbr.rel (%p183) target = $region24
      $region23: #{model_forward.1} parent=5 // pred_region
        // Predicated region
        $region25: #{model_forward.1} parent=23 // pred_check
          %p186 = pneg %p31
        $region26: #{model_forward.1} parent=23 // pred_check_branch
          %188 = sbr.rel (%p186) target = $region28
        $region27: #{model_forward.1} parent=23 // pred_region
          %s189 = sand.u32 %s21, 1
          %s190 = sand.u32 %s21, 1
          %s191 = smul.addr %s190, 32
          %s192 = scalar_lea.vmem [#allocation4], %s191
          %s193 = smul.u32 4, %s11
          %s194 = ssub.s32 10, %s193
          %p195 = scmp.lt.s32.totalorder %s194, 4
          %s196 = scalar_select %p195, %s194, 4
          %s197 = smul.u32 128, %s196
          %p198 = scmp.ne.s32.totalorder 0, %s197
          %s199 = smul.addr %s193, 4
          %s200 = scalar_lea.vmem %s0, %s199
          %s201 = smul.u32 %s196, 4
          // Predicated region
          $region29: #{model_forward.1} parent=27 // pred_check
            %p202 = pneg %p198
          $region30: #{model_forward.1} parent=27 // pred_check_branch
            %204 = sbr.rel (%p202) target = $region32
          $region31: #{model_forward.1} parent=27 // pred_region
            %p205 = scmp.lt.u32.totalorder %s201, 8
            %p206 = pneg %p205
            // Predicated region
            $region33: #{model_forward.1} parent=31 // pred_check
              _
            $region34: #{model_forward.1} parent=31 // pred_check_branch
              %208 = sbr.rel (%p205) target = $region36
            $region35: #{model_forward.1} parent=31 // pred_region
              %s226 = sand.u32 %s201, 7
              %p227 = scmp.eq.s32.totalorder %s226, 0
              // Predicated region
              $region48: #{model_forward.1} parent=35 // pred_check
                %p228 = pneg %p227
              $region49: #{model_forward.1} parent=35 // pred_check_branch
                %230 = sbr.rel (%p228) target = $region51
              $region50: #{model_forward.1} parent=35 // pred_region
                %s231 = sshrl.u32 %s201, 3
                %s232 = sshrl.u32 %s231, 5
                // While loop
                $region52: #{model_forward.1} parent=50 // loop_pre_header
                  _
                $region53: #{model_forward.1} parent=50 // loop_header
                  %s236 = sphi 0, %s238
                  %p237 = scmp.ge.s32.totalorder %s236, %s232
                  %s241 = sphi 0, %s374
                  %s242 = sphi %s200, %s377
                  %s243 = sphi %s192, %s378
                $region54: #{model_forward.1} parent=50 // loop_header_branch
                  %240 = sbr.rel (%p237) target = $region58
                $region55: #{model_forward.1} parent=50 // loop_body
                  %v244 = vld [vmem:[%s242] sm:$0xff]
                  %245 = vst [vmem:[%s243] sm:$0xff] %v244
                  %v246 = vld [vmem:[%s242 + $0x8] sm:$0xff]
                  %247 = vst [vmem:[%s243 + $0x8] sm:$0xff] %v246
                  %v248 = vld [vmem:[%s242 + $0x10] sm:$0xff]
                  %249 = vst [vmem:[%s243 + $0x10] sm:$0xff] %v248
                  %v250 = vld [vmem:[%s242 + $0x18] sm:$0xff]
                  %251 = vst [vmem:[%s243 + $0x18] sm:$0xff] %v250
                  %v252 = vld [vmem:[%s242 + $0x20] sm:$0xff]
                  %253 = vst [vmem:[%s243 + $0x20] sm:$0xff] %v252
                  %v254 = vld [vmem:[%s242 + $0x28] sm:$0xff]
                  %255 = vst [vmem:[%s243 + $0x28] sm:$0xff] %v254
                  %v256 = vld [vmem:[%s242 + $0x30] sm:$0xff]
                  %257 = vst [vmem:[%s243 + $0x30] sm:$0xff] %v256
                  %v258 = vld [vmem:[%s242 + $0x38] sm:$0xff]
                  %259 = vst [vmem:[%s243 + $0x38] sm:$0xff] %v258
                  %v260 = vld [vmem:[%s242 + $0x40] sm:$0xff]
                  %261 = vst [vmem:[%s243 + $0x40] sm:$0xff] %v260
                  %v262 = vld [vmem:[%s242 + $0x48] sm:$0xff]
                  %263 = vst [vmem:[%s243 + $0x48] sm:$0xff] %v262
                  %v264 = vld [vmem:[%s242 + $0x50] sm:$0xff]
                  %265 = vst [vmem:[%s243 + $0x50] sm:$0xff] %v264
                  %v266 = vld [vmem:[%s242 + $0x58] sm:$0xff]
                  %267 = vst [vmem:[%s243 + $0x58] sm:$0xff] %v266
                  %v268 = vld [vmem:[%s242 + $0x60] sm:$0xff]
                  %269 = vst [vmem:[%s243 + $0x60] sm:$0xff] %v268
                  %v270 = vld [vmem:[%s242 + $0x68] sm:$0xff]
                  %271 = vst [vmem:[%s243 + $0x68] sm:$0xff] %v270
                  %v272 = vld [vmem:[%s242 + $0x70] sm:$0xff]
                  %273 = vst [vmem:[%s243 + $0x70] sm:$0xff] %v272
                  %v274 = vld [vmem:[%s242 + $0x78] sm:$0xff]
                  %275 = vst [vmem:[%s243 + $0x78] sm:$0xff] %v274
                  %v276 = vld [vmem:[%s242 + $0x80] sm:$0xff]
                  %277 = vst [vmem:[%s243 + $0x80] sm:$0xff] %v276
                  %v278 = vld [vmem:[%s242 + $0x88] sm:$0xff]
                  %279 = vst [vmem:[%s243 + $0x88] sm:$0xff] %v278
                  %v280 = vld [vmem:[%s242 + $0x90] sm:$0xff]
                  %281 = vst [vmem:[%s243 + $0x90] sm:$0xff] %v280
                  %v282 = vld [vmem:[%s242 + $0x98] sm:$0xff]
                  %283 = vst [vmem:[%s243 + $0x98] sm:$0xff] %v282
                  %v284 = vld [vmem:[%s242 + $0xa0] sm:$0xff]
                  %285 = vst [vmem:[%s243 + $0xa0] sm:$0xff] %v284
                  %v286 = vld [vmem:[%s242 + $0xa8] sm:$0xff]
                  %287 = vst [vmem:[%s243 + $0xa8] sm:$0xff] %v286
                  %v288 = vld [vmem:[%s242 + $0xb0] sm:$0xff]
                  %289 = vst [vmem:[%s243 + $0xb0] sm:$0xff] %v288
                  %v290 = vld [vmem:[%s242 + $0xb8] sm:$0xff]
                  %291 = vst [vmem:[%s243 + $0xb8] sm:$0xff] %v290
                  %v292 = vld [vmem:[%s242 + $0xc0] sm:$0xff]
                  %293 = vst [vmem:[%s243 + $0xc0] sm:$0xff] %v292
                  %v294 = vld [vmem:[%s242 + $0xc8] sm:$0xff]
                  %295 = vst [vmem:[%s243 + $0xc8] sm:$0xff] %v294
                  %v296 = vld [vmem:[%s242 + $0xd0] sm:$0xff]
                  %297 = vst [vmem:[%s243 + $0xd0] sm:$0xff] %v296
                  %v298 = vld [vmem:[%s242 + $0xd8] sm:$0xff]
                  %299 = vst [vmem:[%s243 + $0xd8] sm:$0xff] %v298
                  %v300 = vld [vmem:[%s242 + $0xe0] sm:$0xff]
                  %301 = vst [vmem:[%s243 + $0xe0] sm:$0xff] %v300
                  %v302 = vld [vmem:[%s242 + $0xe8] sm:$0xff]
                  %303 = vst [vmem:[%s243 + $0xe8] sm:$0xff] %v302
                  %v304 = vld [vmem:[%s242 + $0xf0] sm:$0xff]
                  %305 = vst [vmem:[%s243 + $0xf0] sm:$0xff] %v304
                  %v306 = vld [vmem:[%s242 + $0xf8] sm:$0xff]
                  %307 = vst [vmem:[%s243 + $0xf8] sm:$0xff] %v306
                  %v308 = vld [vmem:[%s242 + $0x28] sm:$0xff]
                  %309 = vst [vmem:[%s243 + $0x10] sm:$0xff] %v308
                  %v310 = vld [vmem:[%s242 + $0x30] sm:$0xff]
                  %311 = vst [vmem:[%s243 + $0x18] sm:$0xff] %v310
                  %v312 = vld [vmem:[%s242 + $0x38] sm:$0xff]
                  %313 = vst [vmem:[%s243 + $0x20] sm:$0xff] %v312
                  %v314 = vld [vmem:[%s242 + $0x40] sm:$0xff]
                  %315 = vst [vmem:[%s243 + $0x28] sm:$0xff] %v314
                  %v316 = vld [vmem:[%s242 + $0x48] sm:$0xff]
                  %317 = vst [vmem:[%s243 + $0x30] sm:$0xff] %v316
                  %v318 = vld [vmem:[%s242 + $0x50] sm:$0xff]
                  %319 = vst [vmem:[%s243 + $0x38] sm:$0xff] %v318
                  %v320 = vld [vmem:[%s242 + $0x58] sm:$0xff]
                  %321 = vst [vmem:[%s243 + $0x40] sm:$0xff] %v320
                  %v322 = vld [vmem:[%s242 + $0x60] sm:$0xff]
                  %323 = vst [vmem:[%s243 + $0x48] sm:$0xff] %v322
                  %v324 = vld [vmem:[%s242 + $0x68] sm:$0xff]
                  %325 = vst [vmem:[%s243 + $0x50] sm:$0xff] %v324
                  %v326 = vld [vmem:[%s242 + $0x70] sm:$0xff]
                  %327 = vst [vmem:[%s243 + $0x58] sm:$0xff] %v326
                  %v328 = vld [vmem:[%s242 + $0x78] sm:$0xff]
                  %329 = vst [vmem:[%s243 + $0x60] sm:$0xff] %v328
                  %v330 = vld [vmem:[%s242 + $0x80] sm:$0xff]
                  %331 = vst [vmem:[%s243 + $0x68] sm:$0xff] %v330
                  %v332 = vld [vmem:[%s242 + $0x88] sm:$0xff]
                  %333 = vst [vmem:[%s243 + $0x70] sm:$0xff] %v332
                  %v334 = vld [vmem:[%s242 + $0x90] sm:$0xff]
                  %335 = vst [vmem:[%s243 + $0x78] sm:$0xff] %v334
                  %v336 = vld [vmem:[%s242 + $0x98] sm:$0xff]
                  %337 = vst [vmem:[%s243 + $0x80] sm:$0xff] %v336
                  %v338 = vld [vmem:[%s242 + $0xa0] sm:$0xff]
                  %339 = vst [vmem:[%s243 + $0x88] sm:$0xff] %v338
                  %v340 = vld [vmem:[%s242 + $0xa8] sm:$0xff]
                  %341 = vst [vmem:[%s243 + $0x90] sm:$0xff] %v340
                  %v342 = vld [vmem:[%s242 + $0xb0] sm:$0xff]
                  %343 = vst [vmem:[%s243 + $0x98] sm:$0xff] %v342
                  %v344 = vld [vmem:[%s242 + $0xb8] sm:$0xff]
                  %345 = vst [vmem:[%s243 + $0xa0] sm:$0xff] %v344
                  %v346 = vld [vmem:[%s242 + $0xc0] sm:$0xff]
                  %347 = vst [vmem:[%s243 + $0xa8] sm:$0xff] %v346
                  %v348 = vld [vmem:[%s242 + $0xc8] sm:$0xff]
                  %349 = vst [vmem:[%s243 + $0xb0] sm:$0xff] %v348
                  %v350 = vld [vmem:[%s242 + $0xd0] sm:$0xff]
                  %351 = vst [vmem:[%s243 + $0xb8] sm:$0xff] %v350
                  %v352 = vld [vmem:[%s242 + $0xd8] sm:$0xff]
                  %353 = vst [vmem:[%s243 + $0xc0] sm:$0xff] %v352
                  %v354 = vld [vmem:[%s242 + $0xe0] sm:$0xff]
                  %355 = vst [vmem:[%s243 + $0xc8] sm:$0xff] %v354
                  %v356 = vld [vmem:[%s242 + $0xe8] sm:$0xff]
                  %357 = vst [vmem:[%s243 + $0xd0] sm:$0xff] %v356
                  %v358 = vld [vmem:[%s242 + $0xf0] sm:$0xff]
                  %359 = vst [vmem:[%s243 + $0xd8] sm:$0xff] %v358
                  %v360 = vld [vmem:[%s242 + $0xf8] sm:$0xff]
                  %361 = vst [vmem:[%s243 + $0xe0] sm:$0xff] %v360
                  %v362 = vld [vmem:[%s242 + $0x100] sm:$0xff]
                  %363 = vst [vmem:[%s243 + $0xe8] sm:$0xff] %v362
                  %v364 = vld [vmem:[%s242 + $0x108] sm:$0xff]
                  %365 = vst [vmem:[%s243 + $0xf0] sm:$0xff] %v364
                  %v366 = vld [vmem:[%s242 + $0x110] sm:$0xff]
                  %367 = vst [vmem:[%s243 + $0xf8] sm:$0xff] %v366
                  %v368 = vld [vmem:[%s242 + $0x118] sm:$0xff]
                  %369 = vst [vmem:[%s243 + $0x100] sm:$0xff] %v368
                  %v370 = vld [vmem:[%s242 + $0x120] sm:$0xff]
                  %371 = vst [vmem:[%s243 + $0x108] sm:$0xff] %v370
                  %s372 = sadd.s32 1, %s241
                  %p373 = scmp.ge.s32.totalorder %s372, %s232
                  %s374 = scalar_select %p373, 0, %s372
                  %s375 = smul.u32 %s374, 256
                  %s376 = smul.u32 %s374, 256
                  %s377 = scalar_lea.vmem %s200, %s375
                  %s378 = scalar_lea.vmem %s192, %s376 [#allocation4]
                $region56: #{model_forward.1} parent=50 // loop_footer
                  %s238 = sadd.s32 %s236, 1
                $region57: #{model_forward.1} parent=50 // loop_footer_branch
                  %235 = sbr.rel target = $region53
                $region58: #{model_forward.1} parent=50 // loop_exit
                  _
                %s379 = sshrl.u32 %s231, 5
                %s380 = sand.u32 %s231, 31
                %s381 = smul.u32 %s379, 32
                %s382 = smul.u32 128, %s381
                %s383 = sshra.s32 %s382, 4
                %s384 = scalar_lea.vmem %s200, %s383
                %s385 = smul.u32 128, %s381
                %s386 = sshra.s32 %s385, 4
                %s387 = scalar_lea.vmem %s192, %s386 [#allocation4]
                // While loop
                $region59: #{model_forward.1} parent=50 // loop_pre_header
                  _
                $region60: #{model_forward.1} parent=50 // loop_header
                  %s391 = sphi 0, %s393
                  %p392 = scmp.ge.s32.totalorder %s391, %s380
                  %s396 = sphi 0, %s405
                  %s397 = sphi %s384, %s408
                  %s398 = sphi %s387, %s409
                $region61: #{model_forward.1} parent=50 // loop_header_branch
                  %395 = sbr.rel (%p392) target = $region65
                $region62: #{model_forward.1} parent=50 // loop_body
                  %v399 = vld [vmem:[%s397] sm:$0xff]
                  %400 = vst [vmem:[%s398] sm:$0xff] %v399
                  %v401 = vld [vmem:[%s397 + $0x28] sm:$0xff]
                  %402 = vst [vmem:[%s398 + $0x10] sm:$0xff] %v401
                  %s403 = sadd.s32 1, %s396
                  %p404 = scmp.ge.s32.totalorder %s403, %s380
                  %s405 = scalar_select %p404, 0, %s403
                  %s406 = smul.u32 %s405, 8
                  %s407 = smul.u32 %s405, 8
                  %s408 = scalar_lea.vmem %s384, %s406
                  %s409 = scalar_lea.vmem %s387, %s407 [#allocation4]
                $region63: #{model_forward.1} parent=50 // loop_footer
                  %s393 = sadd.s32 %s391, 1
                $region64: #{model_forward.1} parent=50 // loop_footer_branch
                  %390 = sbr.rel target = $region60
                $region65: #{model_forward.1} parent=50 // loop_exit
                  _
              $region51: #{model_forward.1} parent=35 // pred_fallthru
                _
              %p410 = pneg %p227
              // Predicated region
              $region66: #{model_forward.1} parent=35 // pred_check
                _
              $region67: #{model_forward.1} parent=35 // pred_check_branch
                %412 = sbr.rel (%p227) target = $region69
              $region68: #{model_forward.1} parent=35 // pred_region
                %s413 = sand.u32 %s201, 7
                %s414 = ssub.s32 %s201, %s413
                %s415 = scalar_lea.vmem %s200, %s414
                %s416 = ssub.s32 %s201, %s413
                %s417 = scalar_lea.vmem %s192, %s416 [#allocation4]
                %s418 = sshrl.u32 %s201, 3
                %s419 = sshrl.u32 %s418, 5
                // While loop
                $region70: #{model_forward.1} parent=68 // loop_pre_header
                  _
                $region71: #{model_forward.1} parent=68 // loop_header
                  %s423 = sphi 0, %s425
                  %p424 = scmp.ge.s32.totalorder %s423, %s419
                  %s428 = sphi 0, %s561
                  %s429 = sphi %s200, %s564
                  %s430 = sphi %s192, %s565
                $region72: #{model_forward.1} parent=68 // loop_header_branch
                  %427 = sbr.rel (%p424) target = $region76
                $region73: #{model_forward.1} parent=68 // loop_body
                  %v431 = vld [vmem:[%s429] sm:$0xff]
                  %432 = vst [vmem:[%s430] sm:$0xff] %v431
                  %v433 = vld [vmem:[%s429 + $0x8] sm:$0xff]
                  %434 = vst [vmem:[%s430 + $0x8] sm:$0xff] %v433
                  %v435 = vld [vmem:[%s429 + $0x10] sm:$0xff]
                  %436 = vst [vmem:[%s430 + $0x10] sm:$0xff] %v435
                  %v437 = vld [vmem:[%s429 + $0x18] sm:$0xff]
                  %438 = vst [vmem:[%s430 + $0x18] sm:$0xff] %v437
                  %v439 = vld [vmem:[%s429 + $0x20] sm:$0xff]
                  %440 = vst [vmem:[%s430 + $0x20] sm:$0xff] %v439
                  %v441 = vld [vmem:[%s429 + $0x28] sm:$0xff]
                  %442 = vst [vmem:[%s430 + $0x28] sm:$0xff] %v441
                  %v443 = vld [vmem:[%s429 + $0x30] sm:$0xff]
                  %444 = vst [vmem:[%s430 + $0x30] sm:$0xff] %v443
                  %v445 = vld [vmem:[%s429 + $0x38] sm:$0xff]
                  %446 = vst [vmem:[%s430 + $0x38] sm:$0xff] %v445
                  %v447 = vld [vmem:[%s429 + $0x40] sm:$0xff]
                  %448 = vst [vmem:[%s430 + $0x40] sm:$0xff] %v447
                  %v449 = vld [vmem:[%s429 + $0x48] sm:$0xff]
                  %450 = vst [vmem:[%s430 + $0x48] sm:$0xff] %v449
                  %v451 = vld [vmem:[%s429 + $0x50] sm:$0xff]
                  %452 = vst [vmem:[%s430 + $0x50] sm:$0xff] %v451
                  %v453 = vld [vmem:[%s429 + $0x58] sm:$0xff]
                  %454 = vst [vmem:[%s430 + $0x58] sm:$0xff] %v453
                  %v455 = vld [vmem:[%s429 + $0x60] sm:$0xff]
                  %456 = vst [vmem:[%s430 + $0x60] sm:$0xff] %v455
                  %v457 = vld [vmem:[%s429 + $0x68] sm:$0xff]
                  %458 = vst [vmem:[%s430 + $0x68] sm:$0xff] %v457
                  %v459 = vld [vmem:[%s429 + $0x70] sm:$0xff]
                  %460 = vst [vmem:[%s430 + $0x70] sm:$0xff] %v459
                  %v461 = vld [vmem:[%s429 + $0x78] sm:$0xff]
                  %462 = vst [vmem:[%s430 + $0x78] sm:$0xff] %v461
                  %v463 = vld [vmem:[%s429 + $0x80] sm:$0xff]
                  %464 = vst [vmem:[%s430 + $0x80] sm:$0xff] %v463
                  %v465 = vld [vmem:[%s429 + $0x88] sm:$0xff]
                  %466 = vst [vmem:[%s430 + $0x88] sm:$0xff] %v465
                  %v467 = vld [vmem:[%s429 + $0x90] sm:$0xff]
                  %468 = vst [vmem:[%s430 + $0x90] sm:$0xff] %v467
                  %v469 = vld [vmem:[%s429 + $0x98] sm:$0xff]
                  %470 = vst [vmem:[%s430 + $0x98] sm:$0xff] %v469
                  %v471 = vld [vmem:[%s429 + $0xa0] sm:$0xff]
                  %472 = vst [vmem:[%s430 + $0xa0] sm:$0xff] %v471
                  %v473 = vld [vmem:[%s429 + $0xa8] sm:$0xff]
                  %474 = vst [vmem:[%s430 + $0xa8] sm:$0xff] %v473
                  %v475 = vld [vmem:[%s429 + $0xb0] sm:$0xff]
                  %476 = vst [vmem:[%s430 + $0xb0] sm:$0xff] %v475
                  %v477 = vld [vmem:[%s429 + $0xb8] sm:$0xff]
                  %478 = vst [vmem:[%s430 + $0xb8] sm:$0xff] %v477
                  %v479 = vld [vmem:[%s429 + $0xc0] sm:$0xff]
                  %480 = vst [vmem:[%s430 + $0xc0] sm:$0xff] %v479
                  %v481 = vld [vmem:[%s429 + $0xc8] sm:$0xff]
                  %482 = vst [vmem:[%s430 + $0xc8] sm:$0xff] %v481
                  %v483 = vld [vmem:[%s429 + $0xd0] sm:$0xff]
                  %484 = vst [vmem:[%s430 + $0xd0] sm:$0xff] %v483
                  %v485 = vld [vmem:[%s429 + $0xd8] sm:$0xff]
                  %486 = vst [vmem:[%s430 + $0xd8] sm:$0xff] %v485
                  %v487 = vld [vmem:[%s429 + $0xe0] sm:$0xff]
                  %488 = vst [vmem:[%s430 + $0xe0] sm:$0xff] %v487
                  %v489 = vld [vmem:[%s429 + $0xe8] sm:$0xff]
                  %490 = vst [vmem:[%s430 + $0xe8] sm:$0xff] %v489
                  %v491 = vld [vmem:[%s429 + $0xf0] sm:$0xff]
                  %492 = vst [vmem:[%s430 + $0xf0] sm:$0xff] %v491
                  %v493 = vld [vmem:[%s429 + $0xf8] sm:$0xff]
                  %494 = vst [vmem:[%s430 + $0xf8] sm:$0xff] %v493
                  %v495 = vld [vmem:[%s429 + $0x28] sm:$0xff]
                  %496 = vst [vmem:[%s430 + $0x10] sm:$0xff] %v495
                  %v497 = vld [vmem:[%s429 + $0x30] sm:$0xff]
                  %498 = vst [vmem:[%s430 + $0x18] sm:$0xff] %v497
                  %v499 = vld [vmem:[%s429 + $0x38] sm:$0xff]
                  %500 = vst [vmem:[%s430 + $0x20] sm:$0xff] %v499
                  %v501 = vld [vmem:[%s429 + $0x40] sm:$0xff]
                  %502 = vst [vmem:[%s430 + $0x28] sm:$0xff] %v501
                  %v503 = vld [vmem:[%s429 + $0x48] sm:$0xff]
                  %504 = vst [vmem:[%s430 + $0x30] sm:$0xff] %v503
                  %v505 = vld [vmem:[%s429 + $0x50] sm:$0xff]
                  %506 = vst [vmem:[%s430 + $0x38] sm:$0xff] %v505
                  %v507 = vld [vmem:[%s429 + $0x58] sm:$0xff]
                  %508 = vst [vmem:[%s430 + $0x40] sm:$0xff] %v507
                  %v509 = vld [vmem:[%s429 + $0x60] sm:$0xff]
                  %510 = vst [vmem:[%s430 + $0x48] sm:$0xff] %v509
                  %v511 = vld [vmem:[%s429 + $0x68] sm:$0xff]
                  %512 = vst [vmem:[%s430 + $0x50] sm:$0xff] %v511
                  %v513 = vld [vmem:[%s429 + $0x70] sm:$0xff]
                  %514 = vst [vmem:[%s430 + $0x58] sm:$0xff] %v513
                  %v515 = vld [vmem:[%s429 + $0x78] sm:$0xff]
                  %516 = vst [vmem:[%s430 + $0x60] sm:$0xff] %v515
                  %v517 = vld [vmem:[%s429 + $0x80] sm:$0xff]
                  %518 = vst [vmem:[%s430 + $0x68] sm:$0xff] %v517
                  %v519 = vld [vmem:[%s429 + $0x88] sm:$0xff]
                  %520 = vst [vmem:[%s430 + $0x70] sm:$0xff] %v519
                  %v521 = vld [vmem:[%s429 + $0x90] sm:$0xff]
                  %522 = vst [vmem:[%s430 + $0x78] sm:$0xff] %v521
                  %v523 = vld [vmem:[%s429 + $0x98] sm:$0xff]
                  %524 = vst [vmem:[%s430 + $0x80] sm:$0xff] %v523
                  %v525 = vld [vmem:[%s429 + $0xa0] sm:$0xff]
                  %526 = vst [vmem:[%s430 + $0x88] sm:$0xff] %v525
                  %v527 = vld [vmem:[%s429 + $0xa8] sm:$0xff]
                  %528 = vst [vmem:[%s430 + $0x90] sm:$0xff] %v527
                  %v529 = vld [vmem:[%s429 + $0xb0] sm:$0xff]
                  %530 = vst [vmem:[%s430 + $0x98] sm:$0xff] %v529
                  %v531 = vld [vmem:[%s429 + $0xb8] sm:$0xff]
                  %532 = vst [vmem:[%s430 + $0xa0] sm:$0xff] %v531
                  %v533 = vld [vmem:[%s429 + $0xc0] sm:$0xff]
                  %534 = vst [vmem:[%s430 + $0xa8] sm:$0xff] %v533
                  %v535 = vld [vmem:[%s429 + $0xc8] sm:$0xff]
                  %536 = vst [vmem:[%s430 + $0xb0] sm:$0xff] %v535
                  %v537 = vld [vmem:[%s429 + $0xd0] sm:$0xff]
                  %538 = vst [vmem:[%s430 + $0xb8] sm:$0xff] %v537
                  %v539 = vld [vmem:[%s429 + $0xd8] sm:$0xff]
                  %540 = vst [vmem:[%s430 + $0xc0] sm:$0xff] %v539
                  %v541 = vld [vmem:[%s429 + $0xe0] sm:$0xff]
                  %542 = vst [vmem:[%s430 + $0xc8] sm:$0xff] %v541
                  %v543 = vld [vmem:[%s429 + $0xe8] sm:$0xff]
                  %544 = vst [vmem:[%s430 + $0xd0] sm:$0xff] %v543
                  %v545 = vld [vmem:[%s429 + $0xf0] sm:$0xff]
                  %546 = vst [vmem:[%s430 + $0xd8] sm:$0xff] %v545
                  %v547 = vld [vmem:[%s429 + $0xf8] sm:$0xff]
                  %548 = vst [vmem:[%s430 + $0xe0] sm:$0xff] %v547
                  %v549 = vld [vmem:[%s429 + $0x100] sm:$0xff]
                  %550 = vst [vmem:[%s430 + $0xe8] sm:$0xff] %v549
                  %v551 = vld [vmem:[%s429 + $0x108] sm:$0xff]
                  %552 = vst [vmem:[%s430 + $0xf0] sm:$0xff] %v551
                  %v553 = vld [vmem:[%s429 + $0x110] sm:$0xff]
                  %554 = vst [vmem:[%s430 + $0xf8] sm:$0xff] %v553
                  %v555 = vld [vmem:[%s429 + $0x118] sm:$0xff]
                  %556 = vst [vmem:[%s430 + $0x100] sm:$0xff] %v555
                  %v557 = vld [vmem:[%s429 + $0x120] sm:$0xff]
                  %558 = vst [vmem:[%s430 + $0x108] sm:$0xff] %v557
                  %s559 = sadd.s32 1, %s428
                  %p560 = scmp.ge.s32.totalorder %s559, %s419
                  %s561 = scalar_select %p560, 0, %s559
                  %s562 = smul.u32 %s561, 256
                  %s563 = smul.u32 %s561, 256
                  %s564 = scalar_lea.vmem %s200, %s562
                  %s565 = scalar_lea.vmem %s192, %s563 [#allocation4]
                $region74: #{model_forward.1} parent=68 // loop_footer
                  %s425 = sadd.s32 %s423, 1
                $region75: #{model_forward.1} parent=68 // loop_footer_branch
                  %422 = sbr.rel target = $region71
                $region76: #{model_forward.1} parent=68 // loop_exit
                  _
                %s566 = sshrl.u32 %s418, 5
                %s567 = sand.u32 %s418, 31
                %s568 = smul.u32 %s566, 32
                %s569 = smul.u32 128, %s568
                %s570 = sshra.s32 %s569, 4
                %s571 = scalar_lea.vmem %s200, %s570
                %s572 = smul.u32 128, %s568
                %s573 = sshra.s32 %s572, 4
                %s574 = scalar_lea.vmem %s192, %s573 [#allocation4]
                // While loop
                $region77: #{model_forward.1} parent=68 // loop_pre_header
                  _
                $region78: #{model_forward.1} parent=68 // loop_header
                  %s578 = sphi 0, %s580
                  %p579 = scmp.ge.s32.totalorder %s578, %s567
                  %s583 = sphi 0, %s592
                  %s584 = sphi %s571, %s595
                  %s585 = sphi %s574, %s596
                $region79: #{model_forward.1} parent=68 // loop_header_branch
                  %582 = sbr.rel (%p579) target = $region83
                $region80: #{model_forward.1} parent=68 // loop_body
                  %v586 = vld [vmem:[%s584] sm:$0xff]
                  %587 = vst [vmem:[%s585] sm:$0xff] %v586
                  %v588 = vld [vmem:[%s584 + $0x28] sm:$0xff]
                  %589 = vst [vmem:[%s585 + $0x10] sm:$0xff] %v588
                  %s590 = sadd.s32 1, %s583
                  %p591 = scmp.ge.s32.totalorder %s590, %s567
                  %s592 = scalar_select %p591, 0, %s590
                  %s593 = smul.u32 %s592, 8
                  %s594 = smul.u32 %s592, 8
                  %s595 = scalar_lea.vmem %s571, %s593
                  %s596 = scalar_lea.vmem %s574, %s594 [#allocation4]
                $region81: #{model_forward.1} parent=68 // loop_footer
                  %s580 = sadd.s32 %s578, 1
                $region82: #{model_forward.1} parent=68 // loop_footer_branch
                  %577 = sbr.rel target = $region78
                $region83: #{model_forward.1} parent=68 // loop_exit
                  _
                %s597 = sshll.u32 1, %s413
                %s598 = ssub.s32 %s597, 1
                loop: start=0, step=1, limit=1
                $region84: #{model_forward.1} parent=68 // loop_pre_header
                  _
                $region85: #{model_forward.1} parent=68 // loop_header
                  %s600 = sphi 0, %s604
                  %p601 = scmp.ge.s32.totalorder %s600, 1
                  %s605 = sphi %s415, %s415
                  %s606 = sphi %s417, %s417
                $region86: #{model_forward.1} parent=68 // loop_header_branch
                  %603 = sbr.rel (%p601) target = $region90
                $region87: #{model_forward.1} parent=68 // loop_body
                  %v607 = vld [vmem:[%s605] sm:%s598]
                  %608 = vst [vmem:[%s606] sm:%s598] %v607
                  %v609 = vld [vmem:[%s605 + $0x28] sm:%s598]
                  %610 = vst [vmem:[%s606 + $0x10] sm:%s598] %v609
                $region88: #{model_forward.1} parent=68 // loop_footer
                  %s604 = sadd.s32 1, %s600
                $region89: #{model_forward.1} parent=68 // loop_footer_branch
                  %599 = sbr.rel target = $region85
                $region90: #{model_forward.1} parent=68 // loop_exit
                  _
              $region69: #{model_forward.1} parent=35 // pred_fallthru
                _
            $region36: #{model_forward.1} parent=31 // pred_fallthru
              _
            // Predicated region
            $region37: #{model_forward.1} parent=31 // pred_check
              %p209 = pneg %p205
            $region38: #{model_forward.1} parent=31 // pred_check_branch
              %211 = sbr.rel (%p209) target = $region40
            $region39: #{model_forward.1} parent=31 // pred_region
              %s212 = sshll.u32 1, %s201
              %s213 = ssub.s32 %s212, 1
              loop: start=0, step=1, limit=1
              $region41: #{model_forward.1} parent=39 // loop_pre_header
                _
              $region42: #{model_forward.1} parent=39 // loop_header
                %s215 = sphi 0, %s219
                %p216 = scmp.ge.s32.totalorder %s215, 1
                %s220 = sphi %s200, %s200
                %s221 = sphi %s192, %s192
              $region43: #{model_forward.1} parent=39 // loop_header_branch
                %218 = sbr.rel (%p216) target = $region47
              $region44: #{model_forward.1} parent=39 // loop_body
                %v222 = vld [vmem:[%s220] sm:%s213]
                %223 = vst [vmem:[%s221] sm:%s213] %v222
                %v224 = vld [vmem:[%s220 + $0x28] sm:%s213]
                %225 = vst [vmem:[%s221 + $0x10] sm:%s213] %v224
              $region45: #{model_forward.1} parent=39 // loop_footer
                %s219 = sadd.s32 1, %s215
              $region46: #{model_forward.1} parent=39 // loop_footer_branch
                %214 = sbr.rel target = $region42
              $region47: #{model_forward.1} parent=39 // loop_exit
                _
            $region40: #{model_forward.1} parent=31 // pred_fallthru
              _
          $region32: #{model_forward.1} parent=27 // pred_fallthru
            _
          %611 = vnop
        $region28: #{model_forward.1} parent=23 // pred_fallthru
          _
        // Predicated region
        $region91: #{model_forward.1} parent=23 // pred_check
          %p612 = pneg %p61
        $region92: #{model_forward.1} parent=23 // pred_check_branch
          %614 = sbr.rel (%p612) target = $region94
        $region93: #{model_forward.1} parent=23 // pred_region
          %s615 = sand.u32 %s51, 1
          %s616 = sand.u32 %s51, 1
          %s617 = smul.addr %s616, 16
          %s618 = scalar_lea.vmem [#allocation5], %s617
          %s619 = sadd.s32 %s11, 1
          %s620 = smul.u32 %s619, 2
          %s621 = smul.u32 2, %s620
          %s622 = smul.addr %s621, 4
          %s623 = scalar_lea.vmem %s1, %s622
          // Predicated region
          $region95: #{model_forward.1} parent=93 // pred_check
            _
          $region96: #{model_forward.1} parent=93 // pred_check_branch
            %625 = sbr.rel (0) target = $region98
          $region97: #{model_forward.1} parent=93 // pred_region
            // Predicated region
            $region99: #{model_forward.1} parent=97 // pred_check
              _
            $region100: #{model_forward.1} parent=97 // pred_check_branch
              %627 = sbr.rel (0) target = $region102
            $region101: #{model_forward.1} parent=97 // pred_region
              // Predicated region
              $region114: #{model_forward.1} parent=101 // pred_check
                _
              $region115: #{model_forward.1} parent=101 // pred_check_branch
                %645 = sbr.rel (0) target = $region117
              $region116: #{model_forward.1} parent=101 // pred_region
                loop: start=0, step=1, limit=1
                $region118: #{model_forward.1} parent=116 // loop_pre_header
                  _
                $region119: #{model_forward.1} parent=116 // loop_header
                  %s647 = sphi 0, %s651
                  %p648 = scmp.ge.s32.totalorder %s647, 1
                  %s652 = sphi %s623, %s623
                  %s653 = sphi %s618, %s618
                $region120: #{model_forward.1} parent=116 // loop_header_branch
                  %650 = sbr.rel (%p648) target = $region124
                $region121: #{model_forward.1} parent=116 // loop_body
                  %v654 = vld [vmem:[%s652] sm:$0xff]
                  %655 = vst [vmem:[%s653] sm:$0xff] %v654
                  %v656 = vld [vmem:[%s652 + $0x28] sm:$0xff]
                  %657 = vst [vmem:[%s653 + $0x8] sm:$0xff] %v656
                $region122: #{model_forward.1} parent=116 // loop_footer
                  %s651 = sadd.s32 1, %s647
                $region123: #{model_forward.1} parent=116 // loop_footer_branch
                  %646 = sbr.rel target = $region119
                $region124: #{model_forward.1} parent=116 // loop_exit
                  _
              $region117: #{model_forward.1} parent=101 // pred_fallthru
                _
              // Predicated region
              $region125: #{model_forward.1} parent=101 // pred_check
                _
              $region126: #{model_forward.1} parent=101 // pred_check_branch
                %659 = sbr.rel target = $region128
              $region127: #{model_forward.1} parent=101 // pred_region
                _
              $region128: #{model_forward.1} parent=101 // pred_fallthru
                _
            $region102: #{model_forward.1} parent=97 // pred_fallthru
              _
            // Predicated region
            $region103: #{model_forward.1} parent=97 // pred_check
              _
            $region104: #{model_forward.1} parent=97 // pred_check_branch
              %629 = sbr.rel target = $region106
            $region105: #{model_forward.1} parent=97 // pred_region
              %s631 = ssub.s32 256, 1
              loop: start=0, step=1, limit=1
              $region107: #{model_forward.1} parent=105 // loop_pre_header
                _
              $region108: #{model_forward.1} parent=105 // loop_header
                %s633 = sphi 0, %s637
                %p634 = scmp.ge.s32.totalorder %s633, 1
                %s638 = sphi %s623, %s623
                %s639 = sphi %s618, %s618
              $region109: #{model_forward.1} parent=105 // loop_header_branch
                %636 = sbr.rel (%p634) target = $region113
              $region110: #{model_forward.1} parent=105 // loop_body
                %v640 = vld [vmem:[%s638] sm:%s631]
                %641 = vst [vmem:[%s639] sm:%s631] %v640
                %v642 = vld [vmem:[%s638 + $0x28] sm:%s631]
                %643 = vst [vmem:[%s639 + $0x8] sm:%s631] %v642
              $region111: #{model_forward.1} parent=105 // loop_footer
                %s637 = sadd.s32 1, %s633
              $region112: #{model_forward.1} parent=105 // loop_footer_branch
                %632 = sbr.rel target = $region108
              $region113: #{model_forward.1} parent=105 // loop_exit
                _
            $region106: #{model_forward.1} parent=97 // pred_fallthru
              _
          $region98: #{model_forward.1} parent=93 // pred_fallthru
            _
          %660 = vnop
        $region94: #{model_forward.1} parent=23 // pred_fallthru
          _
        // Predicated region
        $region129: #{model_forward.1} parent=23 // pred_check
          %p661 = pneg %p129
        $region130: #{model_forward.1} parent=23 // pred_check_branch
          %663 = sbr.rel (%p661) target = $region132
        $region131: #{model_forward.1} parent=23 // pred_region
          %s664 = smul.u32 4, %s11
          %p665 = scmp.lt.s32.totalorder %s664, 7
          %s666 = scalar_select %p665, %s664, 7
          %s667 = smul.addr %s666, 4
          %s668 = scalar_lea.vmem %s4, %s667
          %s669 = smul.u32 4, %s11
        $region132: #{model_forward.1} parent=23 // pred_fallthru
          _
      $region24: #{model_forward.1} parent=5 // pred_fallthru
        _
      %p670 = scmp.le.s32.totalorder 1, %s11
      %p671 = scmp.lt.s32.totalorder %s11, 3
      %p672 = pnand %p670, %p671
      %p673 = pneg %p672
      // Predicated region
      $region133: #{model_forward.1} parent=5 // pred_check
        _
      $region134: #{model_forward.1} parent=5 // pred_check_branch
        %675 = sbr.rel (%p672) target = $region136
      $region135: #{model_forward.1} parent=5 // pred_region
        %s676 = ssub.s32 %s11, 1
        %s677 = sand.u32 %s24, 1
        %s678 = sand.u32 %s24, 1
        %s679 = smul.addr %s678, 32
        %s680 = scalar_lea.vmem [#allocation4], %s679
        // Predicated region
        $region137: #{model_forward.1} parent=135 // pred_check
          %p681 = pneg %p37
        $region138: #{model_forward.1} parent=135 // pred_check_branch
          %683 = sbr.rel (%p681) target = $region140
        $region139: #{model_forward.1} parent=135 // pred_region
          _
        $region140: #{model_forward.1} parent=135 // pred_fallthru
          _
        %s684 = sand.u32 %s54, 1
        %s685 = sand.u32 %s54, 1
        %s686 = smul.addr %s685, 16
        %s687 = scalar_lea.vmem [#allocation5], %s686
        // Predicated region
        $region141: #{model_forward.1} parent=135 // pred_check
          %p688 = pneg %p67
        $region142: #{model_forward.1} parent=135 // pred_check_branch
          %690 = sbr.rel (%p688) target = $region144
        $region143: #{model_forward.1} parent=135 // pred_region
          _
        $region144: #{model_forward.1} parent=135 // pred_fallthru
          _
        %s691 = sand.u32 %s24, 1
        %s692 = sand.u32 %s24, 1
        %s693 = smul.addr %s692, 32
        %s694 = scalar_lea.vmem [#allocation4], %s693
        %p695 = pneg %p37
        %p696 = pneg %p34
        %s697 = sand.u32 %s54, 1
        %s698 = sand.u32 %s54, 1
        %s699 = smul.addr %s698, 16
        %s700 = scalar_lea.vmem [#allocation5], %s699
        %p701 = pneg %p67
        %p702 = pneg %p64
        %p703 = pneg %p88
        %p704 = pneg %p85
        %p705 = pneg %p109
        %p706 = pneg %p106
        %s707 = smul.u32 4, %s16
        %p708 = scmp.lt.s32.totalorder %s707, 7
        %s709 = scalar_select %p708, %s707, 7
        %s710 = smul.addr %s709, 4
        %s711 = scalar_lea.vmem %s4, %s710
        %p712 = pneg %p135
        %p713 = pneg %p132
        %p714 = pneg %p161
        %p715 = pneg %p158
        %s716 = smul.u32 4, %s16
        %p717 = scmp.lt.s32.totalorder %s716, 7
        %s718 = scalar_select %p717, %s716, 7
        %s719 = smul.addr %s718, 4
        %s720 = scalar_lea.vmem %s5, %s719
        %s721 = smul.u32 4, %s16
        %s722 = ssub.s32 10, %s721
        %p723 = scmp.lt.s32.totalorder %s722, 4
        %s724 = scalar_select %p723, %s722, 4
        %s725 = smul.u32 128, %s724
        %s726 = sadd.s32 %s16, 1
        %s727 = smul.u32 %s726, 2
        %s728 = smul.u32 2, %s727
        %s729 = smul.u32 4, %s16
        %p730 = scmp.lt.s32.totalorder %s729, 7
        %s731 = scalar_select %p730, %s729, 7
        %s732 = smul.addr %s731, 4
        %s733 = scalar_lea.vmem %s4, %s732
        %s734 = smul.u32 4, %s16
        %s735 = smul.u32 4, %s16
        %p736 = scmp.lt.s32.totalorder %s735, 7
        %s737 = scalar_select %p736, %s735, 7
        %s738 = smul.addr %s737, 4
        %s739 = scalar_lea.vmem %s5, %s738
        %s740 = smul.u32 4, %s16
        %v742 = vld [vmem:[%s680] sm:$0xff]
        %v743 = vld [vmem:[%s680 + $0x8] sm:$0xff]
        %v744 = vld [vmem:[%s680 + $0x10] sm:$0xff]
        %v745 = vld [vmem:[%s680 + $0x18] sm:$0xff]
        %746 = vst [vmem:[#allocation2] sm:$0xff] %v742
        %747 = vst [vmem:[#allocation2 + $0x8] sm:$0xff] %v743
        %748 = vst [vmem:[#allocation2 + $0x14] sm:$0xff] %v744
        %749 = vst [vmem:[#allocation2 + $0x1c] sm:$0xff] %v745
        %v750 = vld [vmem:[%s687] sm:$0xf]
        %v751 = vld [vmem:[%s687 + $0x8] sm:$0xf]
        %vm752 = vcmask 519168
        %753 = vst.msk [vmem:[#allocation2 + $0x10] sm:$0xf] %vm752, %v750
        %754 = vst.msk [vmem:[#allocation2 + $0x24] sm:$0xf] %vm752, %v751
        %v755 = vld [vmem:[%s680] sm:$0xff]
        %v756 = vld [vmem:[%s680 + $0x8] sm:$0xff]
        %v757 = vld [vmem:[%s680 + $0x10] sm:$0xff]
        %v758 = vld [vmem:[%s680 + $0x18] sm:$0xff]
        %763 = vrot.lane.b32.xlu0 %v755, 127
        %v764 = vpop.permute.xlu0 %763
        %765 = vrot.lane.b32.xlu0 %v756, 127
        %v766 = vpop.permute.xlu0 %765
        %767 = vrot.lane.b32.xlu0 %v757, 127
        %v768 = vpop.permute.xlu0 %767
        %769 = vrot.lane.b32.xlu0 %v758, 127
        %v770 = vpop.permute.xlu0 %769
        %v771 = vrot.slane %v764, 4
        %v772 = vrot.slane %v766, 4
        %v773 = vrot.slane %v768, 4
        %v774 = vrot.slane %v770, 4
        %vm775 = vcmask 1043456
        %v776 = vsel %vm775, %v771, %v772
        %vm777 = vcmask 1039360
        %v778 = vsel %vm777, %v764, %v776
        %v779 = vsel %vm777, %v766, %v772
        %v780 = vsel %vm775, %v773, %v774
        %v781 = vsel %vm777, %v768, %v780
        %v782 = vsel %vm777, %v770, %v774
        %787 = vst [vmem:[#allocation2 + $0x28] sm:$0xff] %v778
        %vm788 = vcmask 1043456
        %vm789 = vcmask 1039364
        %vm790 = vmor %vm789, %vm788
        %791 = vst.msk [vmem:[#allocation2 + $0x30] sm:$0xff] %vm790, %v779
        %792 = vst [vmem:[#allocation2 + $0x3c] sm:$0xff] %v781
        %793 = vst.msk [vmem:[#allocation2 + $0x44] sm:$0xff] %vm790, %v782
        %v794 = vld [vmem:[%s687] sm:$0xf]
        %v795 = vld [vmem:[%s687 + $0x8] sm:$0xf]
        %798 = vrot.lane.b32.xlu0 %v794, 127
        %v799 = vpop.permute.xlu0 %798
        %800 = vrot.lane.b32.xlu0 %v795, 127
        %v801 = vpop.permute.xlu0 %800
        %v802 = vrot.slane %v799, 4
        %v803 = vrot.slane %v801, 4
        %v804 = vsel %vm777, %v802, %v799
        %v805 = vsel %vm777, %v803, %v801
        %vm808 = vcmask 1044472
        %vm809 = vcmask 523268
        %vm810 = vmor %vm809, %vm808
        %811 = vst.msk [vmem:[#allocation2 + $0x34] sm:$0xff] %vm810, %v804
        %812 = vst.msk [vmem:[#allocation2 + $0x48] sm:$0xff] %vm810, %v805
        %v813 = vld [vmem:[%s680] sm:$0xff]
        %v814 = vld [vmem:[%s680 + $0x8] sm:$0xff]
        %v815 = vld [vmem:[%s680 + $0x10] sm:$0xff]
        %v816 = vld [vmem:[%s680 + $0x18] sm:$0xff]
        %821 = vrot.lane.b32.xlu0 %v813, 126
        %v822 = vpop.permute.xlu0 %821
        %823 = vrot.lane.b32.xlu0 %v814, 126
        %v824 = vpop.permute.xlu0 %823
        %825 = vrot.lane.b32.xlu0 %v815, 126
        %v826 = vpop.permute.xlu0 %825
        %827 = vrot.lane.b32.xlu0 %v816, 126
        %v828 = vpop.permute.xlu0 %827
        %v829 = vrot.slane %v822, 4
        %v830 = vrot.slane %v824, 4
        %v831 = vrot.slane %v826, 4
        %v832 = vrot.slane %v828, 4
        %v833 = vsel %vm775, %v829, %v830
        %vm834 = vcmask 1031168
        %v835 = vsel %vm834, %v822, %v833
        %v836 = vsel %vm834, %v824, %v830
        %v837 = vsel %vm775, %v831, %v832
        %v838 = vsel %vm834, %v826, %v837
        %v839 = vsel %vm834, %v828, %v832
        %844 = vst [vmem:[#allocation2 + $0x50] sm:$0xff] %v835
        %vm845 = vcmask 1031172
        %vm846 = vmor %vm845, %vm788
        %847 = vst.msk [vmem:[#allocation2 + $0x58] sm:$0xff] %vm846, %v836
        %848 = vst [vmem:[#allocation2 + $0x64] sm:$0xff] %v838
        %849 = vst.msk [vmem:[#allocation2 + $0x6c] sm:$0xff] %vm846, %v839
        %v850 = vld [vmem:[%s687] sm:$0xf]
        %v851 = vld [vmem:[%s687 + $0x8] sm:$0xf]
        %854 = vrot.lane.b32.xlu0 %v850, 126
        %v855 = vpop.permute.xlu0 %854
        %856 = vrot.lane.b32.xlu0 %v851, 126
        %v857 = vpop.permute.xlu0 %856
        %v858 = vrot.slane %v855, 4
        %v859 = vrot.slane %v857, 4
        %v860 = vsel %vm834, %v858, %v855
        %v861 = vsel %vm834, %v859, %v857
        %vm864 = vcmask 1044464
        %vm865 = vmor %vm809, %vm864
        %866 = vst.msk [vmem:[#allocation2 + $0x5c] sm:$0xff] %vm865, %v860
        %867 = vst.msk [vmem:[#allocation2 + $0x70] sm:$0xff] %vm865, %v861
        %v868 = vld [vmem:[%s680] sm:$0xff]
        %v869 = vld [vmem:[%s680 + $0x8] sm:$0xff]
        %v870 = vld [vmem:[%s680 + $0x10] sm:$0xff]
        %v871 = vld [vmem:[%s680 + $0x18] sm:$0xff]
        %876 = vrot.lane.b32.xlu0 %v868, 96
        %v877 = vpop.permute.xlu0 %876
        %878 = vrot.lane.b32.xlu0 %v869, 96
        %v879 = vpop.permute.xlu0 %878
        %880 = vrot.lane.b32.xlu0 %v870, 96
        %v881 = vpop.permute.xlu0 %880
        %882 = vrot.lane.b32.xlu0 %v871, 96
        %v883 = vpop.permute.xlu0 %882
        %v884 = vrot.slane %v877, 4
        %v885 = vrot.slane %v879, 4
        %v886 = vrot.slane %v881, 4
        %v887 = vrot.slane %v883, 4
        %v888 = vsel %vm775, %v884, %v885
        %vm889 = vcmask 785408
        %v890 = vsel %vm889, %v877, %v888
        %v891 = vsel %vm889, %v879, %v885
        %v892 = vsel %vm775, %v886, %v887
        %v893 = vsel %vm889, %v881, %v892
        %v894 = vsel %vm889, %v883, %v887
        %899 = vst [vmem:[#allocation2 + $0x78] sm:$0xff] %v890
        %vm900 = vcmask 785412
        %vm901 = vmor %vm900, %vm788
        %902 = vst.msk [vmem:[#allocation2 + $0x80] sm:$0xff] %vm901, %v891
        %903 = vst [vmem:[#allocation2 + $0x8c] sm:$0xff] %v893
        %904 = vst.msk [vmem:[#allocation2 + $0x94] sm:$0xff] %vm901, %v894
        %v905 = vld [vmem:[%s687] sm:$0xf]
        %v906 = vld [vmem:[%s687 + $0x8] sm:$0xf]
        %909 = vrot.lane.b32.xlu0 %v905, 96
        %v910 = vpop.permute.xlu0 %909
        %911 = vrot.lane.b32.xlu0 %v906, 96
        %v912 = vpop.permute.xlu0 %911
        %v913 = vrot.slane %v910, 4
        %v914 = vrot.slane %v912, 4
        %v915 = vsel %vm889, %v913, %v910
        %v916 = vsel %vm889, %v914, %v912
        %vm919 = vcmask 1044224
        %vm920 = vmor %vm809, %vm919
        %921 = vst.msk [vmem:[#allocation2 + $0x84] sm:$0xff] %vm920, %v915
        %922 = vst.msk [vmem:[#allocation2 + $0x98] sm:$0xff] %vm920, %v916
        %v923 = vld [vmem:[%s680] sm:$0xff]
        %v924 = vld [vmem:[%s680 + $0x8] sm:$0xff]
        %v925 = vld [vmem:[%s680 + $0x10] sm:$0xff]
        %v926 = vld [vmem:[%s680 + $0x18] sm:$0xff]
        %931 = vrot.lane.b32.xlu0 %v923, 95
        %v932 = vpop.permute.xlu0 %931
        %933 = vrot.lane.b32.xlu0 %v924, 95
        %v934 = vpop.permute.xlu0 %933
        %935 = vrot.lane.b32.xlu0 %v925, 95
        %v936 = vpop.permute.xlu0 %935
        %937 = vrot.lane.b32.xlu0 %v926, 95
        %v938 = vpop.permute.xlu0 %937
        %v939 = vrot.slane %v932, 4
        %v940 = vrot.slane %v934, 4
        %v941 = vrot.slane %v936, 4
        %v942 = vrot.slane %v938, 4
        %v943 = vsel %vm775, %v939, %v940
        %vm944 = vcmask 777216
        %v945 = vsel %vm944, %v932, %v943
        %v946 = vsel %vm944, %v934, %v940
        %v947 = vsel %vm775, %v941, %v942
        %v948 = vsel %vm944, %v936, %v947
        %v949 = vsel %vm944, %v938, %v942
        %954 = vst [vmem:[#allocation2 + $0xa0] sm:$0xff] %v945
        %vm955 = vcmask 777220
        %vm956 = vmor %vm955, %vm788
        %957 = vst.msk [vmem:[#allocation2 + $0xa8] sm:$0xff] %vm956, %v946
        %958 = vst [vmem:[#allocation2 + $0xb4] sm:$0xff] %v948
        %959 = vst.msk [vmem:[#allocation2 + $0xbc] sm:$0xff] %vm956, %v949
        %v960 = vld [vmem:[%s687] sm:$0xf]
        %v961 = vld [vmem:[%s687 + $0x8] sm:$0xf]
        %964 = vrot.lane.b32.xlu0 %v960, 95
        %v965 = vpop.permute.xlu0 %964
        %966 = vrot.lane.b32.xlu0 %v961, 95
        %v967 = vpop.permute.xlu0 %966
        %v968 = vrot.slane %v965, 4
        %v969 = vrot.slane %v967, 4
        %v970 = vsel %vm944, %v968, %v965
        %v971 = vsel %vm944, %v969, %v967
        %vm974 = vcmask 1044216
        %vm975 = vmor %vm809, %vm974
        %976 = vst.msk [vmem:[#allocation2 + $0xac] sm:$0xff] %vm975, %v970
        %977 = vst.msk [vmem:[#allocation2 + $0xc0] sm:$0xff] %vm975, %v971
        %v978 = vld [vmem:[%s680] sm:$0xff]
        %v979 = vld [vmem:[%s680 + $0x8] sm:$0xff]
        %v980 = vld [vmem:[%s680 + $0x10] sm:$0xff]
        %v981 = vld [vmem:[%s680 + $0x18] sm:$0xff]
        %986 = vrot.lane.b32.xlu0 %v978, 94
        %v987 = vpop.permute.xlu0 %986
        %988 = vrot.lane.b32.xlu0 %v979, 94
        %v989 = vpop.permute.xlu0 %988
        %990 = vrot.lane.b32.xlu0 %v980, 94
        %v991 = vpop.permute.xlu0 %990
        %992 = vrot.lane.b32.xlu0 %v981, 94
        %v993 = vpop.permute.xlu0 %992
        %v994 = vrot.slane %v987, 4
        %v995 = vrot.slane %v989, 4
        %v996 = vrot.slane %v991, 4
        %v997 = vrot.slane %v993, 4
        %v998 = vsel %vm775, %v994, %v995
        %vm999 = vcmask 769024
        %v1000 = vsel %vm999, %v987, %v998
        %v1001 = vsel %vm999, %v989, %v995
        %v1002 = vsel %vm775, %v996, %v997
        %v1003 = vsel %vm999, %v991, %v1002
        %v1004 = vsel %vm999, %v993, %v997
        %1009 = vst [vmem:[#allocation2 + $0xc8] sm:$0xff] %v1000
        %vm1010 = vcmask 769028
        %vm1011 = vmor %vm1010, %vm788
        %1012 = vst.msk [vmem:[#allocation2 + $0xd0] sm:$0xff] %vm1011, %v1001
        %1013 = vst [vmem:[#allocation2 + $0xdc] sm:$0xff] %v1003
        %1014 = vst.msk [vmem:[#allocation2 + $0xe4] sm:$0xff] %vm1011, %v1004
        %v1015 = vld [vmem:[%s687] sm:$0xf]
        %v1016 = vld [vmem:[%s687 + $0x8] sm:$0xf]
        %1019 = vrot.lane.b32.xlu0 %v1015, 94
        %v1020 = vpop.permute.xlu0 %1019
        %1021 = vrot.lane.b32.xlu0 %v1016, 94
        %v1022 = vpop.permute.xlu0 %1021
        %v1023 = vrot.slane %v1020, 4
        %v1024 = vrot.slane %v1022, 4
        %v1025 = vsel %vm999, %v1023, %v1020
        %v1026 = vsel %vm999, %v1024, %v1022
        %vm1029 = vcmask 1044208
        %vm1030 = vmor %vm809, %vm1029
        %1031 = vst.msk [vmem:[#allocation2 + $0xd4] sm:$0xff] %vm1030, %v1025
        %1032 = vst.msk [vmem:[#allocation2 + $0xe8] sm:$0xff] %vm1030, %v1026
        %v1033 = vld [vmem:[%s680] sm:$0xff]
        %v1034 = vld [vmem:[%s680 + $0x8] sm:$0xff]
        %v1035 = vld [vmem:[%s680 + $0x10] sm:$0xff]
        %v1036 = vld [vmem:[%s680 + $0x18] sm:$0xff]
        %1041 = vrot.lane.b32.xlu0 %v1033, 64
        %v1042 = vpop.permute.xlu0 %1041
        %1043 = vrot.lane.b32.xlu0 %v1034, 64
        %v1044 = vpop.permute.xlu0 %1043
        %1045 = vrot.lane.b32.xlu0 %v1035, 64
        %v1046 = vpop.permute.xlu0 %1045
        %1047 = vrot.lane.b32.xlu0 %v1036, 64
        %v1048 = vpop.permute.xlu0 %1047
        %v1049 = vrot.slane %v1042, 4
        %v1050 = vrot.slane %v1044, 4
        %v1051 = vrot.slane %v1046, 4
        %v1052 = vrot.slane %v1048, 4
        %v1053 = vsel %vm775, %v1049, %v1050
        %vm1054 = vcmask 523264
        %v1055 = vsel %vm1054, %v1042, %v1053
        %v1056 = vsel %vm1054, %v1044, %v1050
        %v1057 = vsel %vm775, %v1051, %v1052
        %v1058 = vsel %vm1054, %v1046, %v1057
        %v1059 = vsel %vm1054, %v1048, %v1052
        %1064 = vst [vmem:[#allocation2 + $0xf0] sm:$0xff] %v1055
        %vm1065 = vmor %vm809, %vm788
        %1066 = vst.msk [vmem:[#allocation2 + $0xf8] sm:$0xff] %vm1065, %v1056
        %1067 = vst [vmem:[#allocation2 + $0x104] sm:$0xff] %v1058
        %1068 = vst.msk [vmem:[#allocation2 + $0x10c] sm:$0xff] %vm1065, %v1059
        %v1069 = vld [vmem:[%s687] sm:$0xf]
        %v1070 = vld [vmem:[%s687 + $0x8] sm:$0xf]
        %1073 = vrot.lane.b32.xlu0 %v1069, 64
        %v1074 = vpop.permute.xlu0 %1073
        %1075 = vrot.lane.b32.xlu0 %v1070, 64
        %v1076 = vpop.permute.xlu0 %1075
        %v1077 = vrot.slane %v1074, 4
        %v1078 = vrot.slane %v1076, 4
        %v1079 = vsel %vm1054, %v1077, %v1074
        %v1080 = vsel %vm1054, %v1078, %v1076
        %vm1083 = vcmask 1043968
        %vm1084 = vmor %vm809, %vm1083
        %1085 = vst.msk [vmem:[#allocation2 + $0xfc] sm:$0xff] %vm1084, %v1079
        %1086 = vst.msk [vmem:[#allocation2 + $0x110] sm:$0xff] %vm1084, %v1080
        %v1087 = vld [vmem:[%s680] sm:$0xff]
        %v1088 = vld [vmem:[%s680 + $0x8] sm:$0xff]
        %v1089 = vld [vmem:[%s680 + $0x10] sm:$0xff]
        %v1090 = vld [vmem:[%s680 + $0x18] sm:$0xff]
        %1095 = vrot.lane.b32.xlu0 %v1087, 63
        %v1096 = vpop.permute.xlu0 %1095
        %1097 = vrot.lane.b32.xlu0 %v1088, 63
        %v1098 = vpop.permute.xlu0 %1097
        %1099 = vrot.lane.b32.xlu0 %v1089, 63
        %v1100 = vpop.permute.xlu0 %1099
        %1101 = vrot.lane.b32.xlu0 %v1090, 63
        %v1102 = vpop.permute.xlu0 %1101
        %v1103 = vrot.slane %v1096, 4
        %v1104 = vrot.slane %v1098, 4
        %v1105 = vrot.slane %v1100, 4
        %v1106 = vrot.slane %v1102, 4
        %v1107 = vsel %vm775, %v1103, %v1104
        %vm1108 = vcmask 515072
        %v1109 = vsel %vm1108, %v1096, %v1107
        %v1110 = vsel %vm1108, %v1098, %v1104
        %v1111 = vsel %vm775, %v1105, %v1106
        %v1112 = vsel %vm1108, %v1100, %v1111
        %v1113 = vsel %vm1108, %v1102, %v1106
        %1118 = vst [vmem:[#allocation2 + $0x118] sm:$0xff] %v1109
        %vm1119 = vcmask 515076
        %vm1120 = vmor %vm1119, %vm788
        %1121 = vst.msk [vmem:[#allocation2 + $0x120] sm:$0xff] %vm1120, %v1110
        %1122 = vst [vmem:[#allocation2 + $0x12c] sm:$0xff] %v1112
        %1123 = vst.msk [vmem:[#allocation2 + $0x134] sm:$0xff] %vm1120, %v1113
        %v1124 = vld [vmem:[%s687] sm:$0xff]
        %v1125 = vld [vmem:[%s687 + $0x8] sm:$0xff]
        %1128 = vrot.lane.b32.xlu0 %v1124, 63
        %v1129 = vpop.permute.xlu0 %1128
        %1130 = vrot.lane.b32.xlu0 %v1125, 63
        %v1131 = vpop.permute.xlu0 %1130
        %v1132 = vrot.slane %v1129, 4
        %v1133 = vrot.slane %v1131, 4
        %v1134 = vsel %vm1108, %v1132, %v1129
        %v1135 = vsel %vm1108, %v1133, %v1131
        %vm1138 = vcmask 1043960
        %vm1139 = vmor %vm809, %vm1138
        %1140 = vst.msk [vmem:[#allocation2 + $0x124] sm:$0xff] %vm1139, %v1134
        %1141 = vst.msk [vmem:[#allocation2 + $0x138] sm:$0xff] %vm1139, %v1135
        %v1142 = vld [vmem:[%s680] sm:$0xff]
        %v1143 = vld [vmem:[%s680 + $0x8] sm:$0xff]
        %v1144 = vld [vmem:[%s680 + $0x10] sm:$0xff]
        %v1145 = vld [vmem:[%s680 + $0x18] sm:$0xff]
        %1150 = vrot.lane.b32.xlu0 %v1142, 62
        %v1151 = vpop.permute.xlu0 %1150
        %1152 = vrot.lane.b32.xlu0 %v1143, 62
        %v1153 = vpop.permute.xlu0 %1152
        %1154 = vrot.lane.b32.xlu0 %v1144, 62
        %v1155 = vpop.permute.xlu0 %1154
        %1156 = vrot.lane.b32.xlu0 %v1145, 62
        %v1157 = vpop.permute.xlu0 %1156
        %v1158 = vrot.slane %v1151, 4
        %v1159 = vrot.slane %v1153, 4
        %v1160 = vrot.slane %v1155, 4
        %v1161 = vrot.slane %v1157, 4
        %v1162 = vsel %vm775, %v1158, %v1159
        %vm1163 = vcmask 506880
        %v1164 = vsel %vm1163, %v1151, %v1162
        %v1165 = vsel %vm1163, %v1153, %v1159
        %v1166 = vsel %vm775, %v1160, %v1161
        %v1167 = vsel %vm1163, %v1155, %v1166
        %v1168 = vsel %vm1163, %v1157, %v1161
        %1173 = vst [vmem:[#allocation2 + $0x140] sm:$0xff] %v1164
        %vm1174 = vcmask 506884
        %vm1175 = vmor %vm1174, %vm788
        %1176 = vst.msk [vmem:[#allocation2 + $0x148] sm:$0xff] %vm1175, %v1165
        %1177 = vst [vmem:[#allocation2 + $0x154] sm:$0xff] %v1167
        %1178 = vst.msk [vmem:[#allocation2 + $0x15c] sm:$0xff] %vm1175, %v1168
        %v1179 = vld [vmem:[%s687] sm:$0xff]
        %v1180 = vld [vmem:[%s687 + $0x8] sm:$0xff]
        %1183 = vrot.lane.b32.xlu0 %v1179, 62
        %v1184 = vpop.permute.xlu0 %1183
        %1185 = vrot.lane.b32.xlu0 %v1180, 62
        %v1186 = vpop.permute.xlu0 %1185
        %v1187 = vrot.slane %v1184, 4
        %v1188 = vrot.slane %v1186, 4
        %v1189 = vsel %vm1163, %v1187, %v1184
        %v1190 = vsel %vm1163, %v1188, %v1186
        %vm1193 = vcmask 1043952
        %vm1194 = vmor %vm809, %vm1193
        %1195 = vst.msk [vmem:[#allocation2 + $0x14c] sm:$0xff] %vm1194, %v1189
        %1196 = vst.msk [vmem:[#allocation2 + $0x160] sm:$0xff] %vm1194, %v1190
        %v1197 = vld [vmem:[%s2] sm:$0xff]
        %v1198 = vld [vmem:[%s2 + $0x8] sm:$0xff]
        %v1199 = vld [vmem:[#allocation2] sm:$0xff]
        %v1200 = vld [vmem:[#allocation2 + $0x8] sm:$0xff]
        %v1201 = vld [vmem:[#allocation2 + $0x10] sm:$0xf]
        %v1202 = vld [vmem:[#allocation2 + $0x14] sm:$0xff]
        %v1203 = vld [vmem:[#allocation2 + $0x1c] sm:$0xff]
        %v1204 = vld [vmem:[#allocation2 + $0x24] sm:$0xf]
        %v1205 = vld [vmem:[#allocation2 + $0x28] sm:$0xff]
        %v1206 = vld [vmem:[#allocation2 + $0x30] sm:$0xff]
        %v1207 = vld [vmem:[#allocation2 + $0x38] sm:$0xf]
        %v1208 = vld [vmem:[#allocation2 + $0x3c] sm:$0xff]
        %v1209 = vld [vmem:[#allocation2 + $0x44] sm:$0xff]
        %v1210 = vld [vmem:[#allocation2 + $0x4c] sm:$0xf]
        %v1211 = vld [vmem:[#allocation2 + $0x50] sm:$0xff]
        %v1212 = vld [vmem:[#allocation2 + $0x58] sm:$0xff]
        %v1213 = vld [vmem:[#allocation2 + $0x60] sm:$0xf]
        %v1214 = vld [vmem:[#allocation2 + $0x64] sm:$0xff]
        %v1215 = vld [vmem:[#allocation2 + $0x6c] sm:$0xff]
        %v1216 = vld [vmem:[#allocation2 + $0x74] sm:$0xf]
        %v1217 = vld [vmem:[#allocation2 + $0x78] sm:$0xff]
        %v1218 = vld [vmem:[#allocation2 + $0x80] sm:$0xff]
        %v1219 = vld [vmem:[#allocation2 + $0x88] sm:$0xf]
        %v1220 = vld [vmem:[#allocation2 + $0x8c] sm:$0xff]
        %v1221 = vld [vmem:[#allocation2 + $0x94] sm:$0xff]
        %v1222 = vld [vmem:[#allocation2 + $0x9c] sm:$0xf]
        %v1223 = vld [vmem:[#allocation2 + $0xa0] sm:$0xff]
        %v1224 = vld [vmem:[#allocation2 + $0xa8] sm:$0xff]
        %v1225 = vld [vmem:[#allocation2 + $0xb0] sm:$0xf]
        %v1226 = vld [vmem:[#allocation2 + $0xb4] sm:$0xff]
        %v1227 = vld [vmem:[#allocation2 + $0xbc] sm:$0xff]
        %v1228 = vld [vmem:[#allocation2 + $0xc4] sm:$0xf]
        %v1229 = vld [vmem:[#allocation2 + $0xc8] sm:$0xff]
        %v1230 = vld [vmem:[#allocation2 + $0xd0] sm:$0xff]
        %v1231 = vld [vmem:[#allocation2 + $0xd8] sm:$0xf]
        %v1232 = vld [vmem:[#allocation2 + $0xdc] sm:$0xff]
        %v1233 = vld [vmem:[#allocation2 + $0xe4] sm:$0xff]
        %v1234 = vld [vmem:[#allocation2 + $0xec] sm:$0xf]
        %v1235 = vld [vmem:[#allocation2 + $0xf0] sm:$0xff]
        %v1236 = vld [vmem:[#allocation2 + $0xf8] sm:$0xff]
        %v1237 = vld [vmem:[#allocation2 + $0x100] sm:$0xf]
        %v1238 = vld [vmem:[#allocation2 + $0x104] sm:$0xff]
        %v1239 = vld [vmem:[#allocation2 + $0x10c] sm:$0xff]
        %v1240 = vld [vmem:[#allocation2 + $0x114] sm:$0xf]
        %v1241 = vld [vmem:[#allocation2 + $0x118] sm:$0xff]
        %v1242 = vld [vmem:[#allocation2 + $0x120] sm:$0xff]
        %v1243 = vld [vmem:[#allocation2 + $0x128] sm:$0xf]
        %v1244 = vld [vmem:[#allocation2 + $0x12c] sm:$0xff]
        %v1245 = vld [vmem:[#allocation2 + $0x134] sm:$0xff]
        %v1246 = vld [vmem:[#allocation2 + $0x13c] sm:$0xf]
        %v1247 = vld [vmem:[#allocation2 + $0x140] sm:$0xff]
        %v1248 = vld [vmem:[#allocation2 + $0x148] sm:$0xff]
        %v1249 = vld [vmem:[#allocation2 + $0x150] sm:$0xf]
        %v1250 = vld [vmem:[#allocation2 + $0x154] sm:$0xff]
        %v1251 = vld [vmem:[#allocation2 + $0x15c] sm:$0xff]
        %v1252 = vld [vmem:[#allocation2 + $0x164] sm:$0xf]
        %v1255 = vunpack.c.l.b16 %v1197
        %v1256 = vunpack.c.h.b16 %v1197
        %v1257 = vunpack.c.l.b16 %v1198
        %v1258 = vunpack.c.h.b16 %v1198
        %v1259 = vpack.c.b16 %v1257, %v1255
        %v1260 = vpack.c.b16 %v1258, %v1256
        %v1316 = vunpack.c.l.b16 %v1199
        %v1317 = vunpack.c.h.b16 %v1199
        %v1318 = vunpack.c.l.b16 %v1200
        %v1319 = vunpack.c.h.b16 %v1200
        %v1320 = vunpack.c.l.b16 %v1201
        %v1321 = vunpack.c.l.b16 %v1202
        %v1322 = vunpack.c.h.b16 %v1202
        %v1323 = vunpack.c.l.b16 %v1203
        %v1324 = vunpack.c.h.b16 %v1203
        %v1325 = vunpack.c.l.b16 %v1204
        %v1326 = vunpack.c.l.b16 %v1205
        %v1327 = vunpack.c.h.b16 %v1205
        %v1328 = vunpack.c.l.b16 %v1206
        %v1329 = vunpack.c.h.b16 %v1206
        %v1330 = vunpack.c.l.b16 %v1207
        %v1331 = vunpack.c.l.b16 %v1208
        %v1332 = vunpack.c.h.b16 %v1208
        %v1333 = vunpack.c.l.b16 %v1209
        %v1334 = vunpack.c.h.b16 %v1209
        %v1335 = vunpack.c.l.b16 %v1210
        %v1336 = vunpack.c.l.b16 %v1211
        %v1337 = vunpack.c.h.b16 %v1211
        %v1338 = vunpack.c.l.b16 %v1212
        %v1339 = vunpack.c.h.b16 %v1212
        %v1340 = vunpack.c.l.b16 %v1213
        %v1341 = vunpack.c.l.b16 %v1214
        %v1342 = vunpack.c.h.b16 %v1214
        %v1343 = vunpack.c.l.b16 %v1215
        %v1344 = vunpack.c.h.b16 %v1215
        %v1345 = vunpack.c.l.b16 %v1216
        %v1346 = vunpack.c.l.b16 %v1217
        %v1347 = vunpack.c.h.b16 %v1217
        %v1348 = vunpack.c.l.b16 %v1218
        %v1349 = vunpack.c.h.b16 %v1218
        %v1350 = vunpack.c.l.b16 %v1219
        %v1351 = vunpack.c.l.b16 %v1220
        %v1352 = vunpack.c.h.b16 %v1220
        %v1353 = vunpack.c.l.b16 %v1221
        %v1354 = vunpack.c.h.b16 %v1221
        %v1355 = vunpack.c.l.b16 %v1222
        %v1356 = vunpack.c.l.b16 %v1223
        %v1357 = vunpack.c.h.b16 %v1223
        %v1358 = vunpack.c.l.b16 %v1224
        %v1359 = vunpack.c.h.b16 %v1224
        %v1360 = vunpack.c.l.b16 %v1225
        %v1361 = vunpack.c.l.b16 %v1226
        %v1362 = vunpack.c.h.b16 %v1226
        %v1363 = vunpack.c.l.b16 %v1227
        %v1364 = vunpack.c.h.b16 %v1227
        %v1365 = vunpack.c.l.b16 %v1228
        %v1366 = vunpack.c.l.b16 %v1229
        %v1367 = vunpack.c.h.b16 %v1229
        %v1368 = vunpack.c.l.b16 %v1230
        %v1369 = vunpack.c.h.b16 %v1230
        %v1370 = vunpack.c.l.b16 %v1231
        %v1371 = vunpack.c.l.b16 %v1232
        %v1372 = vunpack.c.h.b16 %v1232
        %v1373 = vunpack.c.l.b16 %v1233
        %v1374 = vunpack.c.h.b16 %v1233
        %v1375 = vunpack.c.l.b16 %v1234
        %v1376 = vunpack.c.l.b16 %v1235
        %v1377 = vunpack.c.h.b16 %v1235
        %v1378 = vunpack.c.l.b16 %v1236
        %v1379 = vunpack.c.h.b16 %v1236
        %v1380 = vunpack.c.l.b16 %v1237
        %v1381 = vunpack.c.l.b16 %v1238
        %v1382 = vunpack.c.h.b16 %v1238
        %v1383 = vunpack.c.l.b16 %v1239
        %v1384 = vunpack.c.h.b16 %v1239
        %v1385 = vunpack.c.l.b16 %v1240
        %v1386 = vunpack.c.l.b16 %v1241
        %v1387 = vunpack.c.h.b16 %v1241
        %v1388 = vunpack.c.l.b16 %v1242
        %v1389 = vunpack.c.h.b16 %v1242
        %v1390 = vunpack.c.l.b16 %v1243
        %v1391 = vunpack.c.l.b16 %v1244
        %v1392 = vunpack.c.h.b16 %v1244
        %v1393 = vunpack.c.l.b16 %v1245
        %v1394 = vunpack.c.h.b16 %v1245
        %v1395 = vunpack.c.l.b16 %v1246
        %v1396 = vunpack.c.l.b16 %v1247
        %v1397 = vunpack.c.h.b16 %v1247
        %v1398 = vunpack.c.l.b16 %v1248
        %v1399 = vunpack.c.h.b16 %v1248
        %v1400 = vunpack.c.l.b16 %v1249
        %v1401 = vunpack.c.l.b16 %v1250
        %v1402 = vunpack.c.h.b16 %v1250
        %v1403 = vunpack.c.l.b16 %v1251
        %v1404 = vunpack.c.h.b16 %v1251
        %v1405 = vunpack.c.l.b16 %v1252
        %v1406 = vpack.c.b16 %v1321, %v1316
        %v1407 = vpack.c.b16 %v1322, %v1317
        %v1408 = vpack.c.b16 %v1323, %v1318
        %v1409 = vpack.c.b16 %v1324, %v1319
        %v1410 = vpack.c.b16 %v1325, %v1320
        %v1411 = vpack.c.b16 %v1331, %v1326
        %v1412 = vpack.c.b16 %v1332, %v1327
        %v1413 = vpack.c.b16 %v1333, %v1328
        %v1414 = vpack.c.b16 %v1334, %v1329
        %v1415 = vpack.c.b16 %v1335, %v1330
        %v1416 = vpack.c.b16 %v1341, %v1336
        %v1417 = vpack.c.b16 %v1342, %v1337
        %v1418 = vpack.c.b16 %v1343, %v1338
        %v1419 = vpack.c.b16 %v1344, %v1339
        %v1420 = vpack.c.b16 %v1345, %v1340
        %v1421 = vpack.c.b16 %v1351, %v1346
        %v1422 = vpack.c.b16 %v1352, %v1347
        %v1423 = vpack.c.b16 %v1353, %v1348
        %v1424 = vpack.c.b16 %v1354, %v1349
        %v1425 = vpack.c.b16 %v1355, %v1350
        %v1426 = vpack.c.b16 %v1361, %v1356
        %v1427 = vpack.c.b16 %v1362, %v1357
        %v1428 = vpack.c.b16 %v1363, %v1358
        %v1429 = vpack.c.b16 %v1364, %v1359
        %v1430 = vpack.c.b16 %v1365, %v1360
        %v1431 = vpack.c.b16 %v1371, %v1366
        %v1432 = vpack.c.b16 %v1372, %v1367
        %v1433 = vpack.c.b16 %v1373, %v1368
        %v1434 = vpack.c.b16 %v1374, %v1369
        %v1435 = vpack.c.b16 %v1375, %v1370
        %v1436 = vpack.c.b16 %v1381, %v1376
        %v1437 = vpack.c.b16 %v1382, %v1377
        %v1438 = vpack.c.b16 %v1383, %v1378
        %v1439 = vpack.c.b16 %v1384, %v1379
        %v1440 = vpack.c.b16 %v1385, %v1380
        %v1441 = vpack.c.b16 %v1391, %v1386
        %v1442 = vpack.c.b16 %v1392, %v1387
        %v1443 = vpack.c.b16 %v1393, %v1388
        %v1444 = vpack.c.b16 %v1394, %v1389
        %v1445 = vpack.c.b16 %v1395, %v1390
        %v1446 = vpack.c.b16 %v1401, %v1396
        %v1447 = vpack.c.b16 %v1402, %v1397
        %v1448 = vpack.c.b16 %v1403, %v1398
        %v1449 = vpack.c.b16 %v1404, %v1399
        %v1450 = vpack.c.b16 %v1405, %v1400
        %vm1496 = vcmask 130048
        %v1498 = vsel %vm1496, %v1260, 0
        %1500 = vmatprep.subr.bf16.mxu0 %v1442
        %1501 = vmatpush1.bf16.msra.mxu0 %v1441
        %1502 = vmatprep.subr.bf16.mxu0 %v1437
        %1503 = vmatpush1.bf16.msra.mxu0 %v1436
        %1504 = vmatprep.subr.bf16.mxu0 %v1432
        %1505 = vmatpush1.bf16.msra.mxu0 %v1431
        %1506 = vmatprep.subr.bf16.mxu0 %v1427
        %1507 = vmatpush1.bf16.msra.mxu0 %v1426
        %1508 = vmatprep.subr.bf16.mxu0 %v1422
        %1509 = vmatpush1.bf16.msra.mxu0 %v1421
        %1510 = vmatprep.subr.bf16.mxu0 %v1417
        %1511 = vmatpush1.bf16.msra.mxu0 %v1416
        %1512 = vmatprep.subr.bf16.mxu0 %v1412
        %1513 = vmatpush1.bf16.msra.mxu0 %v1411
        %1514 = vmatprep.subr.bf16.mxu0 %v1407
        %1515 = vmatpush1.bf16.msra.mxu0 %v1406
        %1516 = vmatprep.subr.bf16.mxu0 0
        %1517 = vmatpush2.bf16.msra.mxu0 0
        %1518 = vmatprep.subr.bf16.mxu0 0
        %1519 = vmatpush2.bf16.msra.mxu0 0
        %1520 = vmatprep.subr.bf16.mxu0 0
        %1521 = vmatpush2.bf16.msra.mxu0 0
        %1522 = vmatprep.subr.bf16.mxu0 0
        %1523 = vmatpush2.bf16.msra.mxu0 0
        %1524 = vmatprep.subr.bf16.mxu0 0
        %1525 = vmatpush2.bf16.msra.mxu0 0
        %1526 = vmatprep.subr.bf16.mxu0 0
        %1527 = vmatpush2.bf16.msra.mxu0 0
        %1528 = vmatprep.subr.bf16.mxu0 0
        %1529 = vmatpush2.bf16.msra.mxu0 0
        %1530 = vmatprep.subr.bf16.mxu0 %v1447
        %1531 = vmatpush2.bf16.msra.mxu0 %v1446
        %1532 = vmatprep.mubr.bf16.mxu0 %v1498
        %1533 = vmatmul.mubr.bf16.gmra.mxu0 %v1259
        %v1534 = vpop.f32.mrf.mxu0
        %v1535 = vadd.f32 0.0, %v1534
        %v1536 = vpop.f32.mrf.mxu0
        %v1537 = vadd.f32 0.0, %v1536
        %v1538 = vpop.f32.mrf.mxu0
        %v1539 = vadd.f32 0.0, %v1538
        %v1540 = vpop.f32.mrf.mxu0
        %v1541 = vadd.f32 0.0, %v1540
        %1542 = vdwg.mxu0
        %1543 = vmatprep.subr.bf16.mxu0 %v1444
        %1544 = vmatpush1.bf16.msra.mxu0 %v1443
        %1545 = vmatprep.subr.bf16.mxu0 %v1439
        %1546 = vmatpush1.bf16.msra.mxu0 %v1438
        %1547 = vmatprep.subr.bf16.mxu0 %v1434
        %1548 = vmatpush1.bf16.msra.mxu0 %v1433
        %1549 = vmatprep.subr.bf16.mxu0 %v1429
        %1550 = vmatpush1.bf16.msra.mxu0 %v1428
        %1551 = vmatprep.subr.bf16.mxu0 %v1424
        %1552 = vmatpush1.bf16.msra.mxu0 %v1423
        %1553 = vmatprep.subr.bf16.mxu0 %v1419
        %1554 = vmatpush1.bf16.msra.mxu0 %v1418
        %1555 = vmatprep.subr.bf16.mxu0 %v1414
        %1556 = vmatpush1.bf16.msra.mxu0 %v1413
        %1557 = vmatprep.subr.bf16.mxu0 %v1409
        %1558 = vmatpush1.bf16.msra.mxu0 %v1408
        %1559 = vmatprep.subr.bf16.mxu0 0
        %1560 = vmatpush2.bf16.msra.mxu0 0
        %1561 = vmatprep.subr.bf16.mxu0 0
        %1562 = vmatpush2.bf16.msra.mxu0 0
        %1563 = vmatprep.subr.bf16.mxu0 0
        %1564 = vmatpush2.bf16.msra.mxu0 0
        %1565 = vmatprep.subr.bf16.mxu0 0
        %1566 = vmatpush2.bf16.msra.mxu0 0
        %1567 = vmatprep.subr.bf16.mxu0 0
        %1568 = vmatpush2.bf16.msra.mxu0 0
        %1569 = vmatprep.subr.bf16.mxu0 0
        %1570 = vmatpush2.bf16.msra.mxu0 0
        %1571 = vmatprep.subr.bf16.mxu0 0
        %1572 = vmatpush2.bf16.msra.mxu0 0
        %1573 = vmatprep.subr.bf16.mxu0 %v1449
        %1574 = vmatpush2.bf16.msra.mxu0 %v1448
        %1575 = vmatprep.mubr.bf16.mxu0 %v1498
        %1576 = vmatmul.mubr.bf16.gmra.mxu0 %v1259
        %v1577 = vpop.f32.mrf.mxu0
        %v1578 = vadd.f32 0.0, %v1577
        %v1579 = vpop.f32.mrf.mxu0
        %v1580 = vadd.f32 0.0, %v1579
        %v1581 = vpop.f32.mrf.mxu0
        %v1582 = vadd.f32 0.0, %v1581
        %v1583 = vpop.f32.mrf.mxu0
        %v1584 = vadd.f32 0.0, %v1583
        %1585 = vdwg.mxu0
        %1586 = vmatprep.subr.bf16.mxu0 0
        %1587 = vmatpush1.bf16.msra.mxu0 %v1445
        %1588 = vmatprep.subr.bf16.mxu0 0
        %1589 = vmatpush1.bf16.msra.mxu0 %v1440
        %1590 = vmatprep.subr.bf16.mxu0 0
        %1591 = vmatpush1.bf16.msra.mxu0 %v1435
        %1592 = vmatprep.subr.bf16.mxu0 0
        %1593 = vmatpush1.bf16.msra.mxu0 %v1430
        %1594 = vmatprep.subr.bf16.mxu0 0
        %1595 = vmatpush1.bf16.msra.mxu0 %v1425
        %1596 = vmatprep.subr.bf16.mxu0 0
        %1597 = vmatpush1.bf16.msra.mxu0 %v1420
        %1598 = vmatprep.subr.bf16.mxu0 0
        %1599 = vmatpush1.bf16.msra.mxu0 %v1415
        %1600 = vmatprep.subr.bf16.mxu0 0
        %1601 = vmatpush1.bf16.msra.mxu0 %v1410
        %1602 = vmatprep.subr.bf16.mxu0 0
        %1603 = vmatpush2.bf16.msra.mxu0 0
        %1604 = vmatprep.subr.bf16.mxu0 0
        %1605 = vmatpush2.bf16.msra.mxu0 0
        %1606 = vmatprep.subr.bf16.mxu0 0
        %1607 = vmatpush2.bf16.msra.mxu0 0
        %1608 = vmatprep.subr.bf16.mxu0 0
        %1609 = vmatpush2.bf16.msra.mxu0 0
        %1610 = vmatprep.subr.bf16.mxu0 0
        %1611 = vmatpush2.bf16.msra.mxu0 0
        %1612 = vmatprep.subr.bf16.mxu0 0
        %1613 = vmatpush2.bf16.msra.mxu0 0
        %1614 = vmatprep.subr.bf16.mxu0 0
        %1615 = vmatpush2.bf16.msra.mxu0 0
        %1616 = vmatprep.subr.bf16.mxu0 0
        %1617 = vmatpush2.bf16.msra.mxu0 %v1450
        %1618 = vmatprep.mubr.bf16.mxu0 %v1498
        %1619 = vmatmul.mubr.bf16.gmra.mxu0 %v1259
        %v1620 = vpop.f32.mrf.mxu0
        %v1621 = vadd.f32 0.0, %v1620
        %v1622 = vpop.f32.mrf.mxu0
        %v1623 = vpop.f32.mrf.mxu0
        %v1624 = vadd.f32 0.0, %v1623
        %v1625 = vpop.f32.mrf.mxu0
        %1626 = vdwg.mxu0
        %v1627 = vpack.c.bf16 %v1539, %v1535
        %v1628 = vpack.c.bf16 %v1541, %v1537
        %v1629 = vpack.c.bf16 %v1582, %v1578
        %v1630 = vpack.c.bf16 %v1584, %v1580
        %v1631 = vpack.c.bf16 %v1624, %v1621
        %v1637 = vunpack.c.l.b16 %v1627
        %v1638 = vunpack.c.l.b16 %v1628
        %v1639 = vunpack.c.l.b16 %v1629
        %v1640 = vunpack.c.l.b16 %v1630
        %v1641 = vunpack.c.l.b16 %v1631
        %v1642 = vunpack.c.h.b16 %v1627
        %v1643 = vunpack.c.h.b16 %v1628
        %v1644 = vunpack.c.h.b16 %v1629
        %v1645 = vunpack.c.h.b16 %v1630
        %v1646 = vunpack.c.h.b16 %v1631
        %v1647 = vpack.c.b16 %v1638, %v1637
        %v1648 = vpack.c.b16 %v1640, %v1639
        %v1649 = vpack.c.b16 %v1641, %v1641
        %v1650 = vpack.c.b16 %v1643, %v1642
        %v1651 = vpack.c.b16 %v1645, %v1644
        %v1652 = vpack.c.b16 %v1646, %v1646
        %1659 = vst [vmem:[#allocation3] sm:$0xff] %v1647
        %1660 = vst [vmem:[#allocation3 + $0x8] sm:$0xff] %v1648
        %1661 = vst.msk [vmem:[#allocation3 + $0x10] sm:$0xf] %vm752, %v1649
        %1662 = vst [vmem:[#allocation3 + $0x14] sm:$0xff] %v1650
        %1663 = vst [vmem:[#allocation3 + $0x1c] sm:$0xff] %v1651
        %1664 = vst.msk [vmem:[#allocation3 + $0x24] sm:$0xf] %vm752, %v1652
        %v1665 = vld [vmem:[#allocation3] sm:$0xff]
        %v1666 = vld [vmem:[#allocation3 + $0x8] sm:$0xff]
        %v1667 = vld [vmem:[#allocation3 + $0x14] sm:$0xff]
        %v1668 = vld [vmem:[#allocation3 + $0x1c] sm:$0xff]
        %1669 = vst [vmem:[#allocation2] sm:$0xff] %v1665
        %1670 = vst [vmem:[#allocation2 + $0x8] sm:$0xff] %v1666
        %1671 = vst [vmem:[#allocation2 + $0x14] sm:$0xff] %v1667
        %1672 = vst [vmem:[#allocation2 + $0x1c] sm:$0xff] %v1668
        %v1673 = vld [vmem:[#allocation3] sm:$0xff]
        %v1674 = vld [vmem:[#allocation3 + $0x8] sm:$0xff]
        %v1675 = vld [vmem:[#allocation3 + $0x10] sm:$0xf]
        %v1676 = vld [vmem:[#allocation3 + $0x14] sm:$0xff]
        %v1677 = vld [vmem:[#allocation3 + $0x1c] sm:$0xff]
        %v1678 = vld [vmem:[#allocation3 + $0x24] sm:$0xf]
        %1685 = vrot.lane.b32.xlu0 %v1673, 127
        %v1686 = vpop.permute.xlu0 %1685
        %1687 = vrot.lane.b32.xlu0 %v1674, 127
        %v1688 = vpop.permute.xlu0 %1687
        %1689 = vrot.lane.b32.xlu0 %v1675, 127
        %v1690 = vpop.permute.xlu0 %1689
        %1691 = vrot.lane.b32.xlu0 %v1676, 127
        %v1692 = vpop.permute.xlu0 %1691
        %1693 = vrot.lane.b32.xlu0 %v1677, 127
        %v1694 = vpop.permute.xlu0 %1693
        %1695 = vrot.lane.b32.xlu0 %v1678, 127
        %v1696 = vpop.permute.xlu0 %1695
        %v1697 = vrot.slane %v1686, 4
        %v1698 = vrot.slane %v1688, 4
        %v1699 = vrot.slane %v1690, 4
        %v1700 = vrot.slane %v1692, 4
        %v1701 = vrot.slane %v1694, 4
        %v1702 = vrot.slane %v1696, 4
        %v1703 = vsel %vm775, %v1697, %v1698
        %v1704 = vsel %vm777, %v1686, %v1703
        %v1705 = vsel %vm775, %v1698, %v1699
        %v1706 = vsel %vm777, %v1688, %v1705
        %v1707 = vsel %vm775, %v1700, %v1701
        %v1708 = vsel %vm777, %v1692, %v1707
        %v1709 = vsel %vm775, %v1701, %v1702
        %v1710 = vsel %vm777, %v1694, %v1709
        %1715 = vst [vmem:[#allocation2 + $0x28] sm:$0xff] %v1704
        %1716 = vst [vmem:[#allocation2 + $0x30] sm:$0xff] %v1706
        %1717 = vst [vmem:[#allocation2 + $0x3c] sm:$0xff] %v1708
        %1718 = vst [vmem:[#allocation2 + $0x44] sm:$0xff] %v1710
        %v1719 = vld [vmem:[#allocation3] sm:$0xff]
        %v1720 = vld [vmem:[#allocation3 + $0x8] sm:$0xff]
        %v1721 = vld [vmem:[#allocation3 + $0x10] sm:$0xf]
        %v1722 = vld [vmem:[#allocation3 + $0x14] sm:$0xff]
        %v1723 = vld [vmem:[#allocation3 + $0x1c] sm:$0xff]
        %v1724 = vld [vmem:[#allocation3 + $0x24] sm:$0xf]
        %1731 = vrot.lane.b32.xlu0 %v1719, 126
        %v1732 = vpop.permute.xlu0 %1731
        %1733 = vrot.lane.b32.xlu0 %v1720, 126
        %v1734 = vpop.permute.xlu0 %1733
        %1735 = vrot.lane.b32.xlu0 %v1721, 126
        %v1736 = vpop.permute.xlu0 %1735
        %1737 = vrot.lane.b32.xlu0 %v1722, 126
        %v1738 = vpop.permute.xlu0 %1737
        %1739 = vrot.lane.b32.xlu0 %v1723, 126
        %v1740 = vpop.permute.xlu0 %1739
        %1741 = vrot.lane.b32.xlu0 %v1724, 126
        %v1742 = vpop.permute.xlu0 %1741
        %v1743 = vrot.slane %v1732, 4
        %v1744 = vrot.slane %v1734, 4
        %v1745 = vrot.slane %v1736, 4
        %v1746 = vrot.slane %v1738, 4
        %v1747 = vrot.slane %v1740, 4
        %v1748 = vrot.slane %v1742, 4
        %v1749 = vsel %vm775, %v1743, %v1744
        %v1750 = vsel %vm834, %v1732, %v1749
        %v1751 = vsel %vm775, %v1744, %v1745
        %v1752 = vsel %vm834, %v1734, %v1751
        %v1753 = vsel %vm775, %v1746, %v1747
        %v1754 = vsel %vm834, %v1738, %v1753
        %v1755 = vsel %vm775, %v1747, %v1748
        %v1756 = vsel %vm834, %v1740, %v1755
        %1761 = vst [vmem:[#allocation2 + $0x50] sm:$0xff] %v1750
        %1762 = vst [vmem:[#allocation2 + $0x58] sm:$0xff] %v1752
        %1763 = vst [vmem:[#allocation2 + $0x64] sm:$0xff] %v1754
        %1764 = vst [vmem:[#allocation2 + $0x6c] sm:$0xff] %v1756
        %v1765 = vld [vmem:[#allocation3] sm:$0xff]
        %v1766 = vld [vmem:[#allocation3 + $0x8] sm:$0xff]
        %v1767 = vld [vmem:[#allocation3 + $0x10] sm:$0xf]
        %v1768 = vld [vmem:[#allocation3 + $0x14] sm:$0xff]
        %v1769 = vld [vmem:[#allocation3 + $0x1c] sm:$0xff]
        %v1770 = vld [vmem:[#allocation3 + $0x24] sm:$0xf]
        %1777 = vrot.lane.b32.xlu0 %v1765, 96
        %v1778 = vpop.permute.xlu0 %1777
        %1779 = vrot.lane.b32.xlu0 %v1766, 96
        %v1780 = vpop.permute.xlu0 %1779
        %1781 = vrot.lane.b32.xlu0 %v1767, 96
        %v1782 = vpop.permute.xlu0 %1781
        %1783 = vrot.lane.b32.xlu0 %v1768, 96
        %v1784 = vpop.permute.xlu0 %1783
        %1785 = vrot.lane.b32.xlu0 %v1769, 96
        %v1786 = vpop.permute.xlu0 %1785
        %1787 = vrot.lane.b32.xlu0 %v1770, 96
        %v1788 = vpop.permute.xlu0 %1787
        %v1789 = vrot.slane %v1778, 4
        %v1790 = vrot.slane %v1780, 4
        %v1791 = vrot.slane %v1782, 4
        %v1792 = vrot.slane %v1784, 4
        %v1793 = vrot.slane %v1786, 4
        %v1794 = vrot.slane %v1788, 4
        %v1795 = vsel %vm775, %v1789, %v1790
        %v1796 = vsel %vm889, %v1778, %v1795
        %v1797 = vsel %vm775, %v1790, %v1791
        %v1798 = vsel %vm889, %v1780, %v1797
        %v1799 = vsel %vm775, %v1792, %v1793
        %v1800 = vsel %vm889, %v1784, %v1799
        %v1801 = vsel %vm775, %v1793, %v1794
        %v1802 = vsel %vm889, %v1786, %v1801
        %1807 = vst [vmem:[#allocation2 + $0x78] sm:$0xff] %v1796
        %1808 = vst [vmem:[#allocation2 + $0x80] sm:$0xff] %v1798
        %1809 = vst [vmem:[#allocation2 + $0x8c] sm:$0xff] %v1800
        %1810 = vst [vmem:[#allocation2 + $0x94] sm:$0xff] %v1802
        %v1811 = vld [vmem:[#allocation3] sm:$0xff]
        %v1812 = vld [vmem:[#allocation3 + $0x8] sm:$0xff]
        %v1813 = vld [vmem:[#allocation3 + $0x10] sm:$0xf]
        %v1814 = vld [vmem:[#allocation3 + $0x14] sm:$0xff]
        %v1815 = vld [vmem:[#allocation3 + $0x1c] sm:$0xff]
        %v1816 = vld [vmem:[#allocation3 + $0x24] sm:$0xf]
        %1823 = vrot.lane.b32.xlu0 %v1811, 95
        %v1824 = vpop.permute.xlu0 %1823
        %1825 = vrot.lane.b32.xlu0 %v1812, 95
        %v1826 = vpop.permute.xlu0 %1825
        %1827 = vrot.lane.b32.xlu0 %v1813, 95
        %v1828 = vpop.permute.xlu0 %1827
        %1829 = vrot.lane.b32.xlu0 %v1814, 95
        %v1830 = vpop.permute.xlu0 %1829
        %1831 = vrot.lane.b32.xlu0 %v1815, 95
        %v1832 = vpop.permute.xlu0 %1831
        %1833 = vrot.lane.b32.xlu0 %v1816, 95
        %v1834 = vpop.permute.xlu0 %1833
        %v1835 = vrot.slane %v1824, 4
        %v1836 = vrot.slane %v1826, 4
        %v1837 = vrot.slane %v1828, 4
        %v1838 = vrot.slane %v1830, 4
        %v1839 = vrot.slane %v1832, 4
        %v1840 = vrot.slane %v1834, 4
        %v1841 = vsel %vm775, %v1835, %v1836
        %v1842 = vsel %vm944, %v1824, %v1841
        %v1843 = vsel %vm775, %v1836, %v1837
        %v1844 = vsel %vm944, %v1826, %v1843
        %v1845 = vsel %vm775, %v1838, %v1839
        %v1846 = vsel %vm944, %v1830, %v1845
        %v1847 = vsel %vm775, %v1839, %v1840
        %v1848 = vsel %vm944, %v1832, %v1847
        %1853 = vst [vmem:[#allocation2 + $0xa0] sm:$0xff] %v1842
        %1854 = vst [vmem:[#allocation2 + $0xa8] sm:$0xff] %v1844
        %1855 = vst [vmem:[#allocation2 + $0xb4] sm:$0xff] %v1846
        %1856 = vst [vmem:[#allocation2 + $0xbc] sm:$0xff] %v1848
        %v1857 = vld [vmem:[#allocation3] sm:$0xff]
        %v1858 = vld [vmem:[#allocation3 + $0x8] sm:$0xff]
        %v1859 = vld [vmem:[#allocation3 + $0x10] sm:$0xf]
        %v1860 = vld [vmem:[#allocation3 + $0x14] sm:$0xff]
        %v1861 = vld [vmem:[#allocation3 + $0x1c] sm:$0xff]
        %v1862 = vld [vmem:[#allocation3 + $0x24] sm:$0xf]
        %1869 = vrot.lane.b32.xlu0 %v1857, 94
        %v1870 = vpop.permute.xlu0 %1869
        %1871 = vrot.lane.b32.xlu0 %v1858, 94
        %v1872 = vpop.permute.xlu0 %1871
        %1873 = vrot.lane.b32.xlu0 %v1859, 94
        %v1874 = vpop.permute.xlu0 %1873
        %1875 = vrot.lane.b32.xlu0 %v1860, 94
        %v1876 = vpop.permute.xlu0 %1875
        %1877 = vrot.lane.b32.xlu0 %v1861, 94
        %v1878 = vpop.permute.xlu0 %1877
        %1879 = vrot.lane.b32.xlu0 %v1862, 94
        %v1880 = vpop.permute.xlu0 %1879
        %v1881 = vrot.slane %v1870, 4
        %v1882 = vrot.slane %v1872, 4
        %v1883 = vrot.slane %v1874, 4
        %v1884 = vrot.slane %v1876, 4
        %v1885 = vrot.slane %v1878, 4
        %v1886 = vrot.slane %v1880, 4
        %v1887 = vsel %vm775, %v1881, %v1882
        %v1888 = vsel %vm999, %v1870, %v1887
        %v1889 = vsel %vm775, %v1882, %v1883
        %v1890 = vsel %vm999, %v1872, %v1889
        %v1891 = vsel %vm775, %v1884, %v1885
        %v1892 = vsel %vm999, %v1876, %v1891
        %v1893 = vsel %vm775, %v1885, %v1886
        %v1894 = vsel %vm999, %v1878, %v1893
        %1899 = vst [vmem:[#allocation2 + $0xc8] sm:$0xff] %v1888
        %1900 = vst [vmem:[#allocation2 + $0xd0] sm:$0xff] %v1890
        %1901 = vst [vmem:[#allocation2 + $0xdc] sm:$0xff] %v1892
        %1902 = vst [vmem:[#allocation2 + $0xe4] sm:$0xff] %v1894
        %v1903 = vld [vmem:[#allocation3] sm:$0xff]
        %v1904 = vld [vmem:[#allocation3 + $0x8] sm:$0xff]
        %v1905 = vld [vmem:[#allocation3 + $0x10] sm:$0xf]
        %v1906 = vld [vmem:[#allocation3 + $0x14] sm:$0xff]
        %v1907 = vld [vmem:[#allocation3 + $0x1c] sm:$0xff]
        %v1908 = vld [vmem:[#allocation3 + $0x24] sm:$0xf]
        %1915 = vrot.lane.b32.xlu0 %v1903, 64
        %v1916 = vpop.permute.xlu0 %1915
        %1917 = vrot.lane.b32.xlu0 %v1904, 64
        %v1918 = vpop.permute.xlu0 %1917
        %1919 = vrot.lane.b32.xlu0 %v1905, 64
        %v1920 = vpop.permute.xlu0 %1919
        %1921 = vrot.lane.b32.xlu0 %v1906, 64
        %v1922 = vpop.permute.xlu0 %1921
        %1923 = vrot.lane.b32.xlu0 %v1907, 64
        %v1924 = vpop.permute.xlu0 %1923
        %1925 = vrot.lane.b32.xlu0 %v1908, 64
        %v1926 = vpop.permute.xlu0 %1925
        %v1927 = vrot.slane %v1916, 4
        %v1928 = vrot.slane %v1918, 4
        %v1929 = vrot.slane %v1920, 4
        %v1930 = vrot.slane %v1922, 4
        %v1931 = vrot.slane %v1924, 4
        %v1932 = vrot.slane %v1926, 4
        %v1933 = vsel %vm775, %v1927, %v1928
        %v1934 = vsel %vm1054, %v1916, %v1933
        %v1935 = vsel %vm775, %v1928, %v1929
        %v1936 = vsel %vm1054, %v1918, %v1935
        %v1937 = vsel %vm775, %v1930, %v1931
        %v1938 = vsel %vm1054, %v1922, %v1937
        %v1939 = vsel %vm775, %v1931, %v1932
        %v1940 = vsel %vm1054, %v1924, %v1939
        %1945 = vst [vmem:[#allocation2 + $0xf0] sm:$0xff] %v1934
        %1946 = vst [vmem:[#allocation2 + $0xf8] sm:$0xff] %v1936
        %1947 = vst [vmem:[#allocation2 + $0x104] sm:$0xff] %v1938
        %1948 = vst [vmem:[#allocation2 + $0x10c] sm:$0xff] %v1940
        %v1949 = vld [vmem:[#allocation3] sm:$0xff]
        %v1950 = vld [vmem:[#allocation3 + $0x8] sm:$0xff]
        %v1951 = vld [vmem:[#allocation3 + $0x10] sm:$0xf]
        %v1952 = vld [vmem:[#allocation3 + $0x14] sm:$0xff]
        %v1953 = vld [vmem:[#allocation3 + $0x1c] sm:$0xff]
        %v1954 = vld [vmem:[#allocation3 + $0x24] sm:$0xf]
        %1961 = vrot.lane.b32.xlu0 %v1949, 63
        %v1962 = vpop.permute.xlu0 %1961
        %1963 = vrot.lane.b32.xlu0 %v1950, 63
        %v1964 = vpop.permute.xlu0 %1963
        %1965 = vrot.lane.b32.xlu0 %v1951, 63
        %v1966 = vpop.permute.xlu0 %1965
        %1967 = vrot.lane.b32.xlu0 %v1952, 63
        %v1968 = vpop.permute.xlu0 %1967
        %1969 = vrot.lane.b32.xlu0 %v1953, 63
        %v1970 = vpop.permute.xlu0 %1969
        %1971 = vrot.lane.b32.xlu0 %v1954, 63
        %v1972 = vpop.permute.xlu0 %1971
        %v1973 = vrot.slane %v1962, 4
        %v1974 = vrot.slane %v1964, 4
        %v1975 = vrot.slane %v1966, 4
        %v1976 = vrot.slane %v1968, 4
        %v1977 = vrot.slane %v1970, 4
        %v1978 = vrot.slane %v1972, 4
        %v1979 = vsel %vm775, %v1973, %v1974
        %v1980 = vsel %vm1108, %v1962, %v1979
        %v1981 = vsel %vm775, %v1974, %v1975
        %v1982 = vsel %vm1108, %v1964, %v1981
        %v1983 = vsel %vm775, %v1976, %v1977
        %v1984 = vsel %vm1108, %v1968, %v1983
        %v1985 = vsel %vm775, %v1977, %v1978
        %v1986 = vsel %vm1108, %v1970, %v1985
        %1991 = vst [vmem:[#allocation2 + $0x118] sm:$0xff] %v1980
        %1992 = vst [vmem:[#allocation2 + $0x120] sm:$0xff] %v1982
        %1993 = vst [vmem:[#allocation2 + $0x12c] sm:$0xff] %v1984
        %1994 = vst [vmem:[#allocation2 + $0x134] sm:$0xff] %v1986
        %v1995 = vld [vmem:[#allocation3] sm:$0xff]
        %v1996 = vld [vmem:[#allocation3 + $0x8] sm:$0xff]
        %v1997 = vld [vmem:[#allocation3 + $0x10] sm:$0xf]
        %v1998 = vld [vmem:[#allocation3 + $0x14] sm:$0xff]
        %v1999 = vld [vmem:[#allocation3 + $0x1c] sm:$0xff]
        %v2000 = vld [vmem:[#allocation3 + $0x24] sm:$0xf]
        %2007 = vrot.lane.b32.xlu0 %v1995, 62
        %v2008 = vpop.permute.xlu0 %2007
        %2009 = vrot.lane.b32.xlu0 %v1996, 62
        %v2010 = vpop.permute.xlu0 %2009
        %2011 = vrot.lane.b32.xlu0 %v1997, 62
        %v2012 = vpop.permute.xlu0 %2011
        %2013 = vrot.lane.b32.xlu0 %v1998, 62
        %v2014 = vpop.permute.xlu0 %2013
        %2015 = vrot.lane.b32.xlu0 %v1999, 62
        %v2016 = vpop.permute.xlu0 %2015
        %2017 = vrot.lane.b32.xlu0 %v2000, 62
        %v2018 = vpop.permute.xlu0 %2017
        %v2019 = vrot.slane %v2008, 4
        %v2020 = vrot.slane %v2010, 4
        %v2021 = vrot.slane %v2012, 4
        %v2022 = vrot.slane %v2014, 4
        %v2023 = vrot.slane %v2016, 4
        %v2024 = vrot.slane %v2018, 4
        %v2025 = vsel %vm775, %v2019, %v2020
        %v2026 = vsel %vm1163, %v2008, %v2025
        %v2027 = vsel %vm775, %v2020, %v2021
        %v2028 = vsel %vm1163, %v2010, %v2027
        %v2029 = vsel %vm775, %v2022, %v2023
        %v2030 = vsel %vm1163, %v2014, %v2029
        %v2031 = vsel %vm775, %v2023, %v2024
        %v2032 = vsel %vm1163, %v2016, %v2031
        %2037 = vst [vmem:[#allocation2 + $0x140] sm:$0xff] %v2026
        %2038 = vst [vmem:[#allocation2 + $0x148] sm:$0xff] %v2028
        %2039 = vst [vmem:[#allocation2 + $0x154] sm:$0xff] %v2030
        %2040 = vst [vmem:[#allocation2 + $0x15c] sm:$0xff] %v2032
        %v2041 = vld [vmem:[%s3] sm:$0xf]
        %v2042 = vld [vmem:[#allocation2] sm:$0xff]
        %v2043 = vld [vmem:[#allocation2 + $0x8] sm:$0xff]
        %v2044 = vld [vmem:[#allocation2 + $0x14] sm:$0xff]
        %v2045 = vld [vmem:[#allocation2 + $0x1c] sm:$0xff]
        %v2046 = vld [vmem:[#allocation2 + $0x28] sm:$0xff]
        %v2047 = vld [vmem:[#allocation2 + $0x30] sm:$0xff]
        %v2048 = vld [vmem:[#allocation2 + $0x3c] sm:$0xff]
        %v2049 = vld [vmem:[#allocation2 + $0x44] sm:$0xff]
        %v2050 = vld [vmem:[#allocation2 + $0x50] sm:$0xff]
        %v2051 = vld [vmem:[#allocation2 + $0x58] sm:$0xff]
        %v2052 = vld [vmem:[#allocation2 + $0x64] sm:$0xff]
        %v2053 = vld [vmem:[#allocation2 + $0x6c] sm:$0xff]
        %v2054 = vld [vmem:[#allocation2 + $0x78] sm:$0xff]
        %v2055 = vld [vmem:[#allocation2 + $0x80] sm:$0xff]
        %v2056 = vld [vmem:[#allocation2 + $0x8c] sm:$0xff]
        %v2057 = vld [vmem:[#allocation2 + $0x94] sm:$0xff]
        %v2058 = vld [vmem:[#allocation2 + $0xa0] sm:$0xff]
        %v2059 = vld [vmem:[#allocation2 + $0xa8] sm:$0xff]
        %v2060 = vld [vmem:[#allocation2 + $0xb4] sm:$0xff]
        %v2061 = vld [vmem:[#allocation2 + $0xbc] sm:$0xff]
        %v2062 = vld [vmem:[#allocation2 + $0xc8] sm:$0xff]
        %v2063 = vld [vmem:[#allocation2 + $0xd0] sm:$0xff]
        %v2064 = vld [vmem:[#allocation2 + $0xdc] sm:$0xff]
        %v2065 = vld [vmem:[#allocation2 + $0xe4] sm:$0xff]
        %v2066 = vld [vmem:[#allocation2 + $0xf0] sm:$0xff]
        %v2067 = vld [vmem:[#allocation2 + $0xf8] sm:$0xff]
        %v2068 = vld [vmem:[#allocation2 + $0x104] sm:$0xff]
        %v2069 = vld [vmem:[#allocation2 + $0x10c] sm:$0xff]
        %v2070 = vld [vmem:[#allocation2 + $0x118] sm:$0xff]
        %v2071 = vld [vmem:[#allocation2 + $0x120] sm:$0xff]
        %v2072 = vld [vmem:[#allocation2 + $0x12c] sm:$0xff]
        %v2073 = vld [vmem:[#allocation2 + $0x134] sm:$0xff]
        %v2074 = vld [vmem:[#allocation2 + $0x140] sm:$0xff]
        %v2075 = vld [vmem:[#allocation2 + $0x148] sm:$0xff]
        %v2076 = vld [vmem:[#allocation2 + $0x154] sm:$0xff]
        %v2077 = vld [vmem:[#allocation2 + $0x15c] sm:$0xff]
        %v2078 = vld [vmem:[%s733] sm:$0xff]
        %v2079 = vld [vmem:[%s733 + $0x8] sm:$0xff]
        %v2082 = vunpack.c.l.s4 1983009808
        %v2083 = vunpack.c.0.s8 %v2082
        %v2084 = vlaneseq
        %v2085 = vshrl.u32 %v2084, 7
        %v2086 = vsub.s32 %v2083, %v2085
        %v2087 = vrot.slane %v2041, %v2086
        %v2088 = vcombine.high %v2087, %v2087
        %v2126 = vunpack.c.l.b16 %v2042
        %v2127 = vunpack.c.h.b16 %v2042
        %v2128 = vunpack.c.l.b16 %v2043
        %v2129 = vunpack.c.h.b16 %v2043
        %v2130 = vunpack.c.l.b16 %v2044
        %v2131 = vunpack.c.h.b16 %v2044
        %v2132 = vunpack.c.l.b16 %v2045
        %v2133 = vunpack.c.h.b16 %v2045
        %v2134 = vunpack.c.l.b16 %v2046
        %v2135 = vunpack.c.h.b16 %v2046
        %v2136 = vunpack.c.l.b16 %v2047
        %v2137 = vunpack.c.h.b16 %v2047
        %v2138 = vunpack.c.l.b16 %v2048
        %v2139 = vunpack.c.h.b16 %v2048
        %v2140 = vunpack.c.l.b16 %v2049
        %v2141 = vunpack.c.h.b16 %v2049
        %v2142 = vunpack.c.l.b16 %v2050
        %v2143 = vunpack.c.h.b16 %v2050
        %v2144 = vunpack.c.l.b16 %v2051
        %v2145 = vunpack.c.h.b16 %v2051
        %v2146 = vunpack.c.l.b16 %v2052
        %v2147 = vunpack.c.h.b16 %v2052
        %v2148 = vunpack.c.l.b16 %v2053
        %v2149 = vunpack.c.h.b16 %v2053
        %v2150 = vunpack.c.l.b16 %v2054
        %v2151 = vunpack.c.h.b16 %v2054
        %v2152 = vunpack.c.l.b16 %v2055
        %v2153 = vunpack.c.h.b16 %v2055
        %v2154 = vunpack.c.l.b16 %v2056
        %v2155 = vunpack.c.h.b16 %v2056
        %v2156 = vunpack.c.l.b16 %v2057
        %v2157 = vunpack.c.h.b16 %v2057
        %v2158 = vunpack.c.l.b16 %v2058
        %v2159 = vunpack.c.h.b16 %v2058
        %v2160 = vunpack.c.l.b16 %v2059
        %v2161 = vunpack.c.h.b16 %v2059
        %v2162 = vunpack.c.l.b16 %v2060
        %v2163 = vunpack.c.h.b16 %v2060
        %v2164 = vunpack.c.l.b16 %v2061
        %v2165 = vunpack.c.h.b16 %v2061
        %v2166 = vunpack.c.l.b16 %v2062
        %v2167 = vunpack.c.h.b16 %v2062
        %v2168 = vunpack.c.l.b16 %v2063
        %v2169 = vunpack.c.h.b16 %v2063
        %v2170 = vunpack.c.l.b16 %v2064
        %v2171 = vunpack.c.h.b16 %v2064
        %v2172 = vunpack.c.l.b16 %v2065
        %v2173 = vunpack.c.h.b16 %v2065
        %v2174 = vunpack.c.l.b16 %v2066
        %v2175 = vunpack.c.h.b16 %v2066
        %v2176 = vunpack.c.l.b16 %v2067
        %v2177 = vunpack.c.h.b16 %v2067
        %v2178 = vunpack.c.l.b16 %v2068
        %v2179 = vunpack.c.h.b16 %v2068
        %v2180 = vunpack.c.l.b16 %v2069
        %v2181 = vunpack.c.h.b16 %v2069
        %v2182 = vunpack.c.l.b16 %v2070
        %v2183 = vunpack.c.h.b16 %v2070
        %v2184 = vunpack.c.l.b16 %v2071
        %v2185 = vunpack.c.h.b16 %v2071
        %v2186 = vunpack.c.l.b16 %v2072
        %v2187 = vunpack.c.h.b16 %v2072
        %v2188 = vunpack.c.l.b16 %v2073
        %v2189 = vunpack.c.h.b16 %v2073
        %v2190 = vunpack.c.l.b16 %v2074
        %v2191 = vunpack.c.h.b16 %v2074
        %v2192 = vunpack.c.l.b16 %v2075
        %v2193 = vunpack.c.h.b16 %v2075
        %v2194 = vunpack.c.l.b16 %v2076
        %v2195 = vunpack.c.h.b16 %v2076
        %v2196 = vunpack.c.l.b16 %v2077
        %v2197 = vunpack.c.h.b16 %v2077
        %v2198 = vpack.c.b16 %v2130, %v2126
        %v2199 = vpack.c.b16 %v2131, %v2127
        %v2200 = vpack.c.b16 %v2132, %v2128
        %v2201 = vpack.c.b16 %v2133, %v2129
        %v2202 = vpack.c.b16 %v2138, %v2134
        %v2203 = vpack.c.b16 %v2139, %v2135
        %v2204 = vpack.c.b16 %v2140, %v2136
        %v2205 = vpack.c.b16 %v2141, %v2137
        %v2206 = vpack.c.b16 %v2146, %v2142
        %v2207 = vpack.c.b16 %v2147, %v2143
        %v2208 = vpack.c.b16 %v2148, %v2144
        %v2209 = vpack.c.b16 %v2149, %v2145
        %v2210 = vpack.c.b16 %v2154, %v2150
        %v2211 = vpack.c.b16 %v2155, %v2151
        %v2212 = vpack.c.b16 %v2156, %v2152
        %v2213 = vpack.c.b16 %v2157, %v2153
        %v2214 = vpack.c.b16 %v2162, %v2158
        %v2215 = vpack.c.b16 %v2163, %v2159
        %v2216 = vpack.c.b16 %v2164, %v2160
        %v2217 = vpack.c.b16 %v2165, %v2161
        %v2218 = vpack.c.b16 %v2170, %v2166
        %v2219 = vpack.c.b16 %v2171, %v2167
        %v2220 = vpack.c.b16 %v2172, %v2168
        %v2221 = vpack.c.b16 %v2173, %v2169
        %v2222 = vpack.c.b16 %v2178, %v2174
        %v2223 = vpack.c.b16 %v2179, %v2175
        %v2224 = vpack.c.b16 %v2180, %v2176
        %v2225 = vpack.c.b16 %v2181, %v2177
        %v2226 = vpack.c.b16 %v2186, %v2182
        %v2227 = vpack.c.b16 %v2187, %v2183
        %v2228 = vpack.c.b16 %v2188, %v2184
        %v2229 = vpack.c.b16 %v2189, %v2185
        %v2230 = vpack.c.b16 %v2194, %v2190
        %v2231 = vpack.c.b16 %v2195, %v2191
        %v2232 = vpack.c.b16 %v2196, %v2192
        %v2233 = vpack.c.b16 %v2197, %v2193
        %v2272 = vcombine.high %v2078, %v2078
        %v2273 = vcombine.high %v2079, %v2079
        %v2277 = vsel %vm1496, %v2088, 0
        %2279 = vmatprep.subr.bf16.mxu0 %v2227
        %2280 = vmatpush1.bf16.msra.mxu0 %v2226
        %2281 = vmatprep.subr.bf16.mxu0 %v2223
        %2282 = vmatpush1.bf16.msra.mxu0 %v2222
        %2283 = vmatprep.subr.bf16.mxu0 %v2219
        %2284 = vmatpush1.bf16.msra.mxu0 %v2218
        %2285 = vmatprep.subr.bf16.mxu0 %v2215
        %2286 = vmatpush1.bf16.msra.mxu0 %v2214
        %2287 = vmatprep.subr.bf16.mxu0 %v2211
        %2288 = vmatpush1.bf16.msra.mxu0 %v2210
        %2289 = vmatprep.subr.bf16.mxu0 %v2207
        %2290 = vmatpush1.bf16.msra.mxu0 %v2206
        %2291 = vmatprep.subr.bf16.mxu0 %v2203
        %2292 = vmatpush1.bf16.msra.mxu0 %v2202
        %2293 = vmatprep.subr.bf16.mxu0 %v2199
        %2294 = vmatpush1.bf16.msra.mxu0 %v2198
        %2295 = vmatprep.subr.bf16.mxu0 0
        %2296 = vmatpush2.bf16.msra.mxu0 0
        %2297 = vmatprep.subr.bf16.mxu0 0
        %2298 = vmatpush2.bf16.msra.mxu0 0
        %2299 = vmatprep.subr.bf16.mxu0 0
        %2300 = vmatpush2.bf16.msra.mxu0 0
        %2301 = vmatprep.subr.bf16.mxu0 0
        %2302 = vmatpush2.bf16.msra.mxu0 0
        %2303 = vmatprep.subr.bf16.mxu0 0
        %2304 = vmatpush2.bf16.msra.mxu0 0
        %2305 = vmatprep.subr.bf16.mxu0 0
        %2306 = vmatpush2.bf16.msra.mxu0 0
        %2307 = vmatprep.subr.bf16.mxu0 0
        %2308 = vmatpush2.bf16.msra.mxu0 0
        %2309 = vmatprep.subr.bf16.mxu0 %v2231
        %2310 = vmatpush2.bf16.msra.mxu0 %v2230
        %2311 = vmatprep.mubr.bf16.mxu0 %v2277
        %2312 = vmatmul.mubr.bf16.gmra.mxu0 %v2087
        %v2313 = vpop.f32.mrf.mxu0
        %v2314 = vadd.f32 %v2078, %v2313
        %v2315 = vpop.f32.mrf.mxu0
        %v2316 = vadd.f32 %v2272, %v2315
        %v2317 = vpop.f32.mrf.mxu0
        %v2318 = vpop.f32.mrf.mxu0
        %2319 = vdwg.mxu0
        %2320 = vmatprep.subr.bf16.mxu0 %v2229
        %2321 = vmatpush1.bf16.msra.mxu0 %v2228
        %2322 = vmatprep.subr.bf16.mxu0 %v2225
        %2323 = vmatpush1.bf16.msra.mxu0 %v2224
        %2324 = vmatprep.subr.bf16.mxu0 %v2221
        %2325 = vmatpush1.bf16.msra.mxu0 %v2220
        %2326 = vmatprep.subr.bf16.mxu0 %v2217
        %2327 = vmatpush1.bf16.msra.mxu0 %v2216
        %2328 = vmatprep.subr.bf16.mxu0 %v2213
        %2329 = vmatpush1.bf16.msra.mxu0 %v2212
        %2330 = vmatprep.subr.bf16.mxu0 %v2209
        %2331 = vmatpush1.bf16.msra.mxu0 %v2208
        %2332 = vmatprep.subr.bf16.mxu0 %v2205
        %2333 = vmatpush1.bf16.msra.mxu0 %v2204
        %2334 = vmatprep.subr.bf16.mxu0 %v2201
        %2335 = vmatpush1.bf16.msra.mxu0 %v2200
        %2336 = vmatprep.subr.bf16.mxu0 0
        %2337 = vmatpush2.bf16.msra.mxu0 0
        %2338 = vmatprep.subr.bf16.mxu0 0
        %2339 = vmatpush2.bf16.msra.mxu0 0
        %2340 = vmatprep.subr.bf16.mxu0 0
        %2341 = vmatpush2.bf16.msra.mxu0 0
        %2342 = vmatprep.subr.bf16.mxu0 0
        %2343 = vmatpush2.bf16.msra.mxu0 0
        %2344 = vmatprep.subr.bf16.mxu0 0
        %2345 = vmatpush2.bf16.msra.mxu0 0
        %2346 = vmatprep.subr.bf16.mxu0 0
        %2347 = vmatpush2.bf16.msra.mxu0 0
        %2348 = vmatprep.subr.bf16.mxu0 0
        %2349 = vmatpush2.bf16.msra.mxu0 0
        %2350 = vmatprep.subr.bf16.mxu0 %v2233
        %2351 = vmatpush2.bf16.msra.mxu0 %v2232
        %2352 = vmatprep.mubr.bf16.mxu0 %v2277
        %2353 = vmatmul.mubr.bf16.gmra.mxu0 %v2087
        %v2354 = vpop.f32.mrf.mxu0
        %v2355 = vadd.f32 %v2079, %v2354
        %v2356 = vpop.f32.mrf.mxu0
        %v2357 = vadd.f32 %v2273, %v2356
        %v2358 = vpop.f32.mrf.mxu0
        %v2359 = vpop.f32.mrf.mxu0
        %2360 = vdwg.mxu0
        %v2361 = vmax.f32 %v2314, 0.0
        %v2362 = vmax.f32 %v2316, 0.0
        %v2363 = vmax.f32 %v2355, 0.0
        %v2364 = vmax.f32 %v2357, 0.0
        %v2365 = vmin.f32 %v2361, 1.0
        %v2366 = vmin.f32 %v2362, 1.0
        %v2367 = vmin.f32 %v2363, 1.0
        %v2368 = vmin.f32 %v2364, 1.0
        %v2373 = vcombine.low %v2365, %v2366
        %v2374 = vcombine.low %v2367, %v2368
        %2377 = vst [vmem:[%s739] sm:$0xff] %v2373
        %2378 = vst [vmem:[%s739 + $0x8] sm:$0xff] %v2374
        %s2379 = smul.u32 4, %s16
        %p2380 = scmp.lt.s32.totalorder %s2379, 7
        %s2381 = scalar_select %p2380, %s2379, 7
        %s2382 = smul.addr %s2381, 4
        %s2383 = scalar_lea.vmem %s5, %s2382
        // Predicated region
        $region145: #{model_forward.1} parent=135 // pred_check
          %p2384 = pneg %p158
        $region146: #{model_forward.1} parent=135 // pred_check_branch
          %2386 = sbr.rel (%p2384) target = $region148
        $region147: #{model_forward.1} parent=135 // pred_region
          %s2387 = smul.u32 4, %s16
        $region148: #{model_forward.1} parent=135 // pred_fallthru
          _
      $region136: #{model_forward.1} parent=5 // pred_fallthru
        _
      %p2388 = scmp.le.s32.totalorder 2, %s11
      // Predicated region
      $region149: #{model_forward.1} parent=5 // pred_check
        %p2389 = pneg %p2388
      $region150: #{model_forward.1} parent=5 // pred_check_branch
        %2391 = sbr.rel (%p2389) target = $region152
      $region151: #{model_forward.1} parent=5 // pred_region
        %s2392 = ssub.s32 %s11, 2
        // Predicated region
        $region153: #{model_forward.1} parent=151 // pred_check
          %p2393 = pneg %p164
        $region154: #{model_forward.1} parent=151 // pred_check_branch
          %2395 = sbr.rel (%p2393) target = $region156
        $region155: #{model_forward.1} parent=151 // pred_region
          %s2396 = smul.u32 4, %s17
          %p2397 = scmp.lt.s32.totalorder %s2396, 7
          %s2398 = scalar_select %p2397, %s2396, 7
          %s2399 = smul.addr %s2398, 4
          %s2400 = scalar_lea.vmem %s5, %s2399
        $region156: #{model_forward.1} parent=151 // pred_fallthru
          _
      $region152: #{model_forward.1} parent=5 // pred_fallthru
        _
    $region6: #{model_forward.1} parent=1 // loop_footer
      %s15 = sadd.s32 1, %s11
    $region7: #{model_forward.1} parent=1 // loop_footer_branch
      %10 = sbr.rel target = $region3
    $region8: #{model_forward.1} parent=1 // loop_exit
      _

</llo_original>
